<compile_context>
chip_gen: v5e
topology: v5e:2x2
jax: 0.10.0
libtpu: 0.0.40
codegen_flags: <defaults>
</compile_context>

<pallas_src>
import jax
import jax.numpy as jnp
from jax.experimental import pallas as pl
from jax.experimental.pallas import tpu as pltpu

_LANE = 128
# Inputs at or below this size bypass Pallas (fixed launch/grid-step overhead
# dominates; XLA's fused elementwise is strictly faster for tiny tensors).
_SMALL_FASTPATH_BYTES = 64 * 1024


def _h_sigmoid_math(x):
    # relu6(x + 3) / 6  ==  clip(x + 3, 0, 6) * (1/6)
    return jnp.clip(x + 3.0, 0.0, 6.0) * (1.0 / 6.0)


def _h_sigmoid_kernel(x_ref, o_ref):
    # Purely HBM-bandwidth bound; no compute micro-optimisation is worthwhile.
    o_ref[...] = _h_sigmoid_math(x_ref[...]).astype(o_ref.dtype)


def _vmem_capacity_bytes() -> int:
    """Trace-time VMEM capacity query with a safe fallback."""
    try:
        cap = getattr(pltpu.get_tpu_info(), "vmem_capacity_bytes", None)
        if cap:
            return int(cap)
    except Exception:
        pass
    return 128 * 1024 * 1024


def _select_tiling(itemsize: int):
    """Generation-aware (target_block_bytes, vmem_limit_bytes).

    v5e / v6e (128 MiB physical VMEM): 6 MiB blocks, 48 MiB scoped limit
      (6 MiB x 2 buffers x (in + out) = 24 MiB actually needed -> ample headroom,
       and safe on v5e because we override its 16 MiB scoped default explicitly).
    v7x (64 MiB per TensorCore): 4 MiB blocks, 40 MiB scoped limit
      (16 MiB needed; deliberately NOT 8 MiB blocks, which would hit 32 MiB).
    """
    vmem_cap = _vmem_capacity_bytes()
    if vmem_cap >= (96 << 20):        # v5e / v6e
        return 6 << 20, 48 << 20
    if vmem_cap >= (48 << 20):        # v7x
        return 4 << 20, 40 << 20
    # Conservative fallback for unknown / tiny-VMEM parts.
    return 2 << 20, min(vmem_cap, 16 << 20)


def _h_sigmoid_pallas_2d(x2d: jax.Array) -> jax.Array:
    """Runs the kernel on a lane-dense (rows, 128) slab."""
    rows, lanes = x2d.shape
    assert lanes == _LANE
    dtype = x2d.dtype
    itemsize = jnp.dtype(dtype).itemsize
    # Sublane multiple: 8 (f32), 16 (bf16/f16), 32 (8-bit floats).
    sub = max(8, 32 // max(1, itemsize))

    block_bytes, vmem_limit = _select_tiling(itemsize)
    tile_r = block_bytes // (_LANE * itemsize)
    tile_r = max(sub, (tile_r // sub) * sub)

    if rows <= tile_r:
        if rows >= 2 * sub:
            # Keep at least 2 blocks so both v7x TensorCores stream.
            tile_r = pl.cdiv(pl.cdiv(rows, 2), sub) * sub
        else:
            tile_r = rows  # block == full array extent (tiny slab)

    grid = (pl.cdiv(rows, tile_r),)  # ragged last block is masked by Pallas
    n_elem = rows * _LANE

    return pl.pallas_call(
        _h_sigmoid_kernel,
        out_shape=jax.ShapeDtypeStruct((rows, _LANE), dtype),
        grid=grid,
        in_specs=[pl.BlockSpec((tile_r, _LANE), lambda i: (i, 0))],
        out_specs=pl.BlockSpec((tile_r, _LANE), lambda i: (i, 0)),
        compiler_params=pltpu.CompilerParams(
            dimension_semantics=("parallel",),
            vmem_limit_bytes=vmem_limit,
        ),
        cost_estimate=pl.CostEstimate(
            flops=4 * n_elem,              # add, 2x clamp, scale
            transcendentals=0,
            bytes_accessed=2 * n_elem * itemsize,
        ),
    )(x2d)


def h_sigmoid(x: jax.Array) -> jax.Array:
    """Hard sigmoid relu6(x + 3) / 6, elementwise, any shape (float dtypes)."""
    if not jnp.issubdtype(x.dtype, jnp.floating):
        raise TypeError(f"h_sigmoid expects a floating dtype, got {x.dtype}")

    orig_shape = x.shape
    n_elem = x.size
    itemsize = jnp.dtype(x.dtype).itemsize

    # Tiny-input fast path.
    if n_elem == 0 or n_elem < _LANE or n_elem * itemsize <= _SMALL_FASTPATH_BYTES:
        return _h_sigmoid_math(x).astype(x.dtype)

    if n_elem % _LANE == 0:
        # Common path: pure (free) reshapes, no HBM pad/slice copies.
        rows = n_elem // _LANE
        out2d = _h_sigmoid_pallas_2d(x.reshape(rows, _LANE))
        return out2d.reshape(orig_shape)

    # Ragged path: Pallas on the largest (rows, 128) prefix; the < 128-element
    # tail is computed with plain jnp (no whole-array pad / trailing slice).
    x_flat = x.reshape(-1)
    main = (n_elem // _LANE) * _LANE
    out_head = _h_sigmoid_pallas_2d(x_flat[:main].reshape(main // _LANE, _LANE))
    out_tail = _h_sigmoid_math(x_flat[main:]).astype(x.dtype)
    return jnp.concatenate([out_head.reshape(-1), out_tail]).reshape(orig_shape)


if __name__ == "__main__":
    key = jax.random.PRNGKey(0)
    k1, k2, k3 = jax.random.split(key, 3)

    def ref(v):
        return jnp.clip(v + 3.0, 0.0, 6.0) / 6.0

    # Module-typical small NCHW activation (routes to the tiny-input fast path).
    x_small = jax.random.normal(k1, (2, 4, 16, 16), dtype=jnp.float32) * 4.0
    y_small = jax.block_until_ready(h_sigmoid(x_small))
    assert y_small.shape == x_small.shape and y_small.dtype == x_small.dtype
    assert jnp.allclose(y_small, ref(x_small), atol=1e-6, rtol=1e-6)

    # Larger activation: exercises the multi-block Pallas path (divisible case).
    x_big = jax.random.normal(k2, (2, 64, 64, 64), dtype=jnp.float32) * 4.0
    y_big = jax.block_until_ready(h_sigmoid(x_big))
    assert y_big.shape == x_big.shape and y_big.dtype == x_big.dtype
    assert jnp.allclose(y_big, ref(x_big), atol=1e-6, rtol=1e-6)

    # Non-%128 element count: exercises the ragged Pallas-prefix + jnp-tail path.
    x_rag = jax.random.normal(k3, (3, 5, 7, 11, 67), dtype=jnp.float32) * 4.0
    y_rag = jax.block_until_ready(h_sigmoid(x_rag))
    assert y_rag.shape == x_rag.shape and y_rag.dtype == x_rag.dtype
    assert jnp.allclose(y_rag, ref(x_rag), atol=1e-6, rtol=1e-6)

    print("KERNEL_OK")
</pallas_src>

<mosaic_0001>
module attributes {stable_mosaic.version = 11 : i64} {
  func.func @_h_sigmoid_kernel(%arg0: i32, %arg1: memref<2048x128xf32, #tpu.memory_space<vmem>>, %arg2: memref<2048x128xf32, #tpu.memory_space<vmem>>) attributes {dimension_semantics = [#tpu.dimension_semantics<parallel>], iteration_bounds = array<i64: 2>, scalar_prefetch = 0 : i64, scratch_operands = 0 : i64, tpu.core_type = #tpu.core_type<tc>, window_params = [{transform_indices = @transform_0, window_bounds = array<i64: 2048, 128>}, {transform_indices = @transform_1, window_bounds = array<i64: 2048, 128>}]} {
    %c0 = arith.constant 0 : index
    %c0_0 = arith.constant 0 : index
    %0 = vector.load %arg1[%c0, %c0_0] : memref<2048x128xf32, #tpu.memory_space<vmem>>, vector<2048x128xf32>
    %cst = arith.constant 3.000000e+00 : f32
    %1 = vector.broadcast %cst : f32 to vector<2048x128xf32>
    %2 = arith.addf %0, %1 : vector<2048x128xf32>
    %cst_1 = arith.constant 0.000000e+00 : f32
    %cst_2 = arith.constant 6.000000e+00 : f32
    %3 = vector.broadcast %cst_1 : f32 to vector<2048x128xf32>
    %4 = arith.maximumf %3, %2 : vector<2048x128xf32>
    %5 = vector.broadcast %cst_2 : f32 to vector<2048x128xf32>
    %6 = arith.minimumf %5, %4 : vector<2048x128xf32>
    %cst_3 = arith.constant 0.166666672 : f32
    %7 = vector.broadcast %cst_3 : f32 to vector<2048x128xf32>
    %8 = arith.mulf %6, %7 : vector<2048x128xf32>
    %c0_4 = arith.constant 0 : index
    %c0_5 = arith.constant 0 : index
    %9 = vector.load %arg2[%c0_4, %c0_5] : memref<2048x128xf32, #tpu.memory_space<vmem>>, vector<2048x128xf32>
    tpu.vector_store %arg2[%c0_4, %c0_5], %8 {strides = array<i32>} : memref<2048x128xf32, #tpu.memory_space<vmem>>, vector<2048x128xf32>,
    return
  }
  func.func @transform_0(%arg0: i32) -> (i32, i32) {
    %c0_i32 = arith.constant 0 : i32
    %c0_i32_0 = arith.constant 0 : i32
    return %arg0, %c0_i32 : i32, i32
  }
  func.func @transform_1(%arg0: i32) -> (i32, i32) {
    %c0_i32 = arith.constant 0 : i32
    %c0_i32_0 = arith.constant 0 : i32
    return %arg0, %c0_i32 : i32, i32
  }
}

</mosaic_0001>

<llo_original>
// kernel: tpu_custom_call.1
$region0: #{tpu_custom_call.1}
  #allocation0 [shape = 'u32[]', space=smem, size = 0x4, offset = 0x4, fixed_abs, tag = 'smem constant byte address 0x4 - core index']
  #allocation1 [shape = 'u32[72,128]{1,0:T(1,128)}', space=vmem, size = 0x9000, scoped, tag = 'internal scratch']
  %s0 = inlined_call_operand.hbm [shape: f32[4096,128], index: 0, kind: input, shape index: {}]
  %s1 = inlined_call_operand.hbm [shape: f32[4096,128], index: 1, kind: output, shape index: {}]
  %s2 = sld [smem:[#allocation0]]
  $region41: #{tpu_custom_call.1} parent=0
    _
  %s4 = ssub.s32 1, %s2
  %s5 = scalar_select 0, %s4, %s2
  $region1: #{tpu_custom_call.1} parent=0
    #allocation2 [shape = 'u8[2097152]{0}', space=vmem, size = 0x200000, scoped, tag = 'input window, operand 0']
    #allocation3 [shape = 's32[2]{0}', space=sflag, size = 0x8, scoped, tag = 'scoped memory for tpu_custom_call.1']
    #allocation4 [shape = 's32[2]{0}', space=sflag, size = 0x8, scoped, tag = 'scoped memory for tpu_custom_call.1']
    #allocation5 [shape = 'u8[2097152]{0}', space=vmem, size = 0x200000, scoped, tag = 'output window, operand 0']
    %6 = vsyncpa [#allocation3], 0
    %s7 = scalar_lea.sflag [#allocation3], 1
    %8 = vsyncpa %s7, 0
    %9 = vsyncpa [#allocation4], 0
    %s10 = scalar_lea.sflag [#allocation4], 1
    %11 = vsyncpa %s10, 0
    loop: start=0, step=1, limit=4
    $region2: #{tpu_custom_call.1} parent=1 // loop_pre_header
      _
    $region3: #{tpu_custom_call.1} parent=1 // loop_header
      %s13 = sphi 0, %s17
      %p14 = scmp.ge.s32.totalorder %s13, 4
      %s23 = sphi 0, %s25
      %s26 = sphi 0, %s23
      %s27 = sphi 0, %s26
      %s43 = sphi 0, %s27
      %s49 = sphi 0, %s51
      %s52 = sphi 0, %s49
      %s53 = sphi 0, %s52
      %s69 = sphi 0, %s53
    $region4: #{tpu_custom_call.1} parent=1 // loop_header_branch
      %16 = sbr.rel (%p14) target = $region8
    $region5: #{tpu_custom_call.1} parent=1 // loop_body
      %s18 = ssub.s32 %s13, 1
      %s19 = ssub.s32 %s13, 2
      %s20 = sadd.s32 %s13, 1
      %s21 = ssub.s32 %s13, %s20
      %p22 = scmp.eq.s32.totalorder %s21, 0
      %s24 = sadd.s32 %s23, 1
      %s25 = scalar_select %p22, %s23, %s24
      %p28 = pneg %p22
      %p29 = scmp.eq.s32.totalorder %s13, 1
      %p30 = por %p28, %p29
      %p31 = scmp.ne.s32.totalorder %s23, %s26
      %p32 = scmp.eq.s32.totalorder %s13, 0
      %p33 = por %p31, %p32
      %p34 = scmp.ne.s32.totalorder %s23, %s26
      %p35 = scmp.eq.s32.totalorder %s18, 1
      %p36 = por %p34, %p35
      %p37 = scmp.ne.s32.totalorder %s26, %s27
      %p38 = scmp.eq.s32.totalorder %s18, 0
      %p39 = por %p37, %p38
      %p40 = scmp.ne.s32.totalorder %s26, %s27
      %p41 = scmp.eq.s32.totalorder %s19, 1
      %p42 = por %p40, %p41
      %p44 = scmp.ne.s32.totalorder %s27, %s43
      %p45 = scmp.eq.s32.totalorder %s19, 0
      %p46 = por %p44, %p45
      %s47 = ssub.s32 %s13, %s20
      %p48 = scmp.eq.s32.totalorder %s47, 0
      %s50 = sadd.s32 %s49, 1
      %s51 = scalar_select %p48, %s49, %s50
      %p54 = pneg %p48
      %p55 = scmp.eq.s32.totalorder %s13, 1
      %p56 = por %p54, %p55
      %p57 = scmp.ne.s32.totalorder %s49, %s52
      %p58 = scmp.eq.s32.totalorder %s13, 0
      %p59 = por %p57, %p58
      %p60 = scmp.ne.s32.totalorder %s49, %s52
      %p61 = scmp.eq.s32.totalorder %s18, 1
      %p62 = por %p60, %p61
      %p63 = scmp.ne.s32.totalorder %s52, %s53
      %p64 = scmp.eq.s32.totalorder %s18, 0
      %p65 = por %p63, %p64
      %p66 = scmp.ne.s32.totalorder %s52, %s53
      %p67 = scmp.eq.s32.totalorder %s19, 1
      %p68 = por %p66, %p67
      %p70 = scmp.ne.s32.totalorder %s53, %s69
      %p71 = scmp.eq.s32.totalorder %s19, 0
      %p72 = por %p70, %p71
      %p73 = scmp.le.s32.totalorder 1, %s13
      %p74 = scmp.lt.s32.totalorder %s13, 3
      %p75 = pnand %p73, %p74
      %p76 = pneg %p75
      // Predicated region
      $region9: #{tpu_custom_call.1} parent=5 // pred_check
        _
      $region10: #{tpu_custom_call.1} parent=5 // pred_check_branch
        %78 = sbr.rel (%p75) target = $region12
      $region11: #{tpu_custom_call.1} parent=5 // pred_region
        %s79 = ssub.s32 %s13, 1
      $region12: #{tpu_custom_call.1} parent=5 // pred_fallthru
        _
      %p80 = scmp.lt.s32.totalorder %s13, 2
      // Predicated region
      $region13: #{tpu_custom_call.1} parent=5 // pred_check
        %p81 = pneg %p80
      $region14: #{tpu_custom_call.1} parent=5 // pred_check_branch
        %83 = sbr.rel (%p81) target = $region16
      $region15: #{tpu_custom_call.1} parent=5 // pred_region
        // Predicated region
        $region17: #{tpu_custom_call.1} parent=15 // pred_check
          %p84 = pneg %p33
        $region18: #{tpu_custom_call.1} parent=15 // pred_check_branch
          %86 = sbr.rel (%p84) target = $region20
        $region19: #{tpu_custom_call.1} parent=15 // pred_region
          %s87 = sand.u32 %s23, 1
          %s88 = scalar_lea.sflag [#allocation3], %s87
          %s89 = sand.u32 %s23, 1
          %s90 = smul.addr %s89, 2048
          %s91 = scalar_lea.vmem [#allocation2], %s90
          %s92 = smul.u32 256, %s13
          %94 = vsyncadd %s88, 0
          %s95 = smul.addr %s92, 8
          %s96 = scalar_lea.hbm %s0, %s95
          %s97 = sshll.u32 %s96, 4
          %s98 = int_to_ptr.hbm [resolvable:$true] %s97
          %s99 = sshll.u32 %s91, 4
          %s100 = int_to_ptr.vmem [resolvable:$true] %s99
          %105 = dma.hbm_to_vmem [thread:$0]  %s98, 32768, %s100, %s88, 128, 128, 8
        $region20: #{tpu_custom_call.1} parent=15 // pred_fallthru
          _
      $region16: #{tpu_custom_call.1} parent=5 // pred_fallthru
        _
      %p106 = scmp.le.s32.totalorder 1, %s13
      %p107 = scmp.lt.s32.totalorder %s13, 3
      %p108 = pnand %p106, %p107
      %p109 = pneg %p108
      // Predicated region
      $region21: #{tpu_custom_call.1} parent=5 // pred_check
        _
      $region22: #{tpu_custom_call.1} parent=5 // pred_check_branch
        %111 = sbr.rel (%p108) target = $region24
      $region23: #{tpu_custom_call.1} parent=5 // pred_region
        %s112 = ssub.s32 %s13, 1
        %s113 = sand.u32 %s26, 1
        %s114 = scalar_lea.sflag [#allocation3], %s113
        %s115 = sand.u32 %s26, 1
        %s116 = smul.addr %s115, 2048
        %s117 = scalar_lea.vmem [#allocation2], %s116
        // Predicated region
        $region25: #{tpu_custom_call.1} parent=23 // pred_check
          %p118 = pneg %p39
        $region26: #{tpu_custom_call.1} parent=23 // pred_check_branch
          %120 = sbr.rel (%p118) target = $region28
        $region27: #{tpu_custom_call.1} parent=23 // pred_region
          %122 = dma.done %s114, 32768
        $region28: #{tpu_custom_call.1} parent=23 // pred_fallthru
          _
        %s123 = sand.u32 %s26, 1
        %s124 = scalar_lea.sflag [#allocation3], %s123
        %s125 = sand.u32 %s26, 1
        %s126 = smul.addr %s125, 2048
        %s127 = scalar_lea.vmem [#allocation2], %s126
        %p128 = pneg %p39
        %p129 = pneg %p36
        %p130 = pneg %p65
        %p131 = pneg %p62
        %s132 = sand.u32 %s52, 1
        %s133 = scalar_lea.sflag [#allocation4], %s132
        %s134 = sand.u32 %s52, 1
        %s135 = smul.addr %s134, 2048
        %s136 = scalar_lea.vmem [#allocation5], %s135
        %s137 = smul.u32 256, %s18
        %s138 = smul.u32 256, %s18
        %v139 = vld [vmem:[%s117] sm:$0xff]
        %v140 = vld [vmem:[%s117 + $0x8] sm:$0xff]
        %v141 = vld [vmem:[%s117 + $0x10] sm:$0xff]
        %v142 = vld [vmem:[%s117 + $0x18] sm:$0xff]
        %v143 = vld [vmem:[%s117 + $0x20] sm:$0xff]
        %v144 = vld [vmem:[%s117 + $0x28] sm:$0xff]
        %v145 = vld [vmem:[%s117 + $0x30] sm:$0xff]
        %v146 = vld [vmem:[%s117 + $0x38] sm:$0xff]
        %v147 = vld [vmem:[%s117 + $0x40] sm:$0xff]
        %v148 = vld [vmem:[%s117 + $0x48] sm:$0xff]
        %v149 = vld [vmem:[%s117 + $0x50] sm:$0xff]
        %v150 = vld [vmem:[%s117 + $0x58] sm:$0xff]
        %v151 = vld [vmem:[%s117 + $0x60] sm:$0xff]
        %v152 = vld [vmem:[%s117 + $0x68] sm:$0xff]
        %v153 = vld [vmem:[%s117 + $0x70] sm:$0xff]
        %v154 = vld [vmem:[%s117 + $0x78] sm:$0xff]
        %v155 = vld [vmem:[%s117 + $0x80] sm:$0xff]
        %v156 = vld [vmem:[%s117 + $0x88] sm:$0xff]
        %v157 = vld [vmem:[%s117 + $0x90] sm:$0xff]
        %v158 = vld [vmem:[%s117 + $0x98] sm:$0xff]
        %v159 = vld [vmem:[%s117 + $0xa0] sm:$0xff]
        %v160 = vld [vmem:[%s117 + $0xa8] sm:$0xff]
        %v161 = vld [vmem:[%s117 + $0xb0] sm:$0xff]
        %v162 = vld [vmem:[%s117 + $0xb8] sm:$0xff]
        %v163 = vld [vmem:[%s117 + $0xc0] sm:$0xff]
        %v164 = vld [vmem:[%s117 + $0xc8] sm:$0xff]
        %v165 = vld [vmem:[%s117 + $0xd0] sm:$0xff]
        %v166 = vld [vmem:[%s117 + $0xd8] sm:$0xff]
        %v167 = vld [vmem:[%s117 + $0xe0] sm:$0xff]
        %v168 = vld [vmem:[%s117 + $0xe8] sm:$0xff]
        %v169 = vld [vmem:[%s117 + $0xf0] sm:$0xff]
        %v170 = vld [vmem:[%s117 + $0xf8] sm:$0xff]
        %v171 = vld [vmem:[%s117 + $0x100] sm:$0xff]
        %v172 = vld [vmem:[%s117 + $0x108] sm:$0xff]
        %v173 = vld [vmem:[%s117 + $0x110] sm:$0xff]
        %v174 = vld [vmem:[%s117 + $0x118] sm:$0xff]
        %v175 = vld [vmem:[%s117 + $0x120] sm:$0xff]
        %v176 = vld [vmem:[%s117 + $0x128] sm:$0xff]
        %v177 = vld [vmem:[%s117 + $0x130] sm:$0xff]
        %v178 = vld [vmem:[%s117 + $0x138] sm:$0xff]
        %v179 = vld [vmem:[%s117 + $0x140] sm:$0xff]
        %v180 = vld [vmem:[%s117 + $0x148] sm:$0xff]
        %v181 = vld [vmem:[%s117 + $0x150] sm:$0xff]
        %v182 = vld [vmem:[%s117 + $0x158] sm:$0xff]
        %v183 = vld [vmem:[%s117 + $0x160] sm:$0xff]
        %v184 = vld [vmem:[%s117 + $0x168] sm:$0xff]
        %v185 = vld [vmem:[%s117 + $0x170] sm:$0xff]
        %v186 = vld [vmem:[%s117 + $0x178] sm:$0xff]
        %v187 = vld [vmem:[%s117 + $0x180] sm:$0xff]
        %v188 = vld [vmem:[%s117 + $0x188] sm:$0xff]
        %v189 = vld [vmem:[%s117 + $0x190] sm:$0xff]
        %v190 = vld [vmem:[%s117 + $0x198] sm:$0xff]
        %v191 = vld [vmem:[%s117 + $0x1a0] sm:$0xff]
        %v192 = vld [vmem:[%s117 + $0x1a8] sm:$0xff]
        %v193 = vld [vmem:[%s117 + $0x1b0] sm:$0xff]
        %v194 = vld [vmem:[%s117 + $0x1b8] sm:$0xff]
        %v195 = vld [vmem:[%s117 + $0x1c0] sm:$0xff]
        %v196 = vld [vmem:[%s117 + $0x1c8] sm:$0xff]
        %v197 = vld [vmem:[%s117 + $0x1d0] sm:$0xff]
        %v198 = vld [vmem:[%s117 + $0x1d8] sm:$0xff]
        %v199 = vld [vmem:[%s117 + $0x1e0] sm:$0xff]
        %v200 = vld [vmem:[%s117 + $0x1e8] sm:$0xff]
        %v201 = vld [vmem:[%s117 + $0x1f0] sm:$0xff]
        %v202 = vld [vmem:[%s117 + $0x1f8] sm:$0xff]
        %v203 = vld [vmem:[%s117 + $0x200] sm:$0xff]
        %v204 = vld [vmem:[%s117 + $0x208] sm:$0xff]
        %v205 = vld [vmem:[%s117 + $0x210] sm:$0xff]
        %v206 = vld [vmem:[%s117 + $0x218] sm:$0xff]
        %v207 = vld [vmem:[%s117 + $0x220] sm:$0xff]
        %v208 = vld [vmem:[%s117 + $0x228] sm:$0xff]
        %v209 = vld [vmem:[%s117 + $0x230] sm:$0xff]
        %v210 = vld [vmem:[%s117 + $0x238] sm:$0xff]
        %v211 = vld [vmem:[%s117 + $0x240] sm:$0xff]
        %v212 = vld [vmem:[%s117 + $0x248] sm:$0xff]
        %v213 = vld [vmem:[%s117 + $0x250] sm:$0xff]
        %v214 = vld [vmem:[%s117 + $0x258] sm:$0xff]
        %v215 = vld [vmem:[%s117 + $0x260] sm:$0xff]
        %v216 = vld [vmem:[%s117 + $0x268] sm:$0xff]
        %v217 = vld [vmem:[%s117 + $0x270] sm:$0xff]
        %v218 = vld [vmem:[%s117 + $0x278] sm:$0xff]
        %v219 = vld [vmem:[%s117 + $0x280] sm:$0xff]
        %v220 = vld [vmem:[%s117 + $0x288] sm:$0xff]
        %v221 = vld [vmem:[%s117 + $0x290] sm:$0xff]
        %v222 = vld [vmem:[%s117 + $0x298] sm:$0xff]
        %v223 = vld [vmem:[%s117 + $0x2a0] sm:$0xff]
        %v224 = vld [vmem:[%s117 + $0x2a8] sm:$0xff]
        %v225 = vld [vmem:[%s117 + $0x2b0] sm:$0xff]
        %v226 = vld [vmem:[%s117 + $0x2b8] sm:$0xff]
        %v227 = vld [vmem:[%s117 + $0x2c0] sm:$0xff]
        %v228 = vld [vmem:[%s117 + $0x2c8] sm:$0xff]
        %v229 = vld [vmem:[%s117 + $0x2d0] sm:$0xff]
        %v230 = vld [vmem:[%s117 + $0x2d8] sm:$0xff]
        %v231 = vld [vmem:[%s117 + $0x2e0] sm:$0xff]
        %v232 = vld [vmem:[%s117 + $0x2e8] sm:$0xff]
        %v233 = vld [vmem:[%s117 + $0x2f0] sm:$0xff]
        %v234 = vld [vmem:[%s117 + $0x2f8] sm:$0xff]
        %v235 = vld [vmem:[%s117 + $0x300] sm:$0xff]
        %v236 = vld [vmem:[%s117 + $0x308] sm:$0xff]
        %v237 = vld [vmem:[%s117 + $0x310] sm:$0xff]
        %v238 = vld [vmem:[%s117 + $0x318] sm:$0xff]
        %v239 = vld [vmem:[%s117 + $0x320] sm:$0xff]
        %v240 = vld [vmem:[%s117 + $0x328] sm:$0xff]
        %v241 = vld [vmem:[%s117 + $0x330] sm:$0xff]
        %v242 = vld [vmem:[%s117 + $0x338] sm:$0xff]
        %v243 = vld [vmem:[%s117 + $0x340] sm:$0xff]
        %v244 = vld [vmem:[%s117 + $0x348] sm:$0xff]
        %v245 = vld [vmem:[%s117 + $0x350] sm:$0xff]
        %v246 = vld [vmem:[%s117 + $0x358] sm:$0xff]
        %v247 = vld [vmem:[%s117 + $0x360] sm:$0xff]
        %v248 = vld [vmem:[%s117 + $0x368] sm:$0xff]
        %v249 = vld [vmem:[%s117 + $0x370] sm:$0xff]
        %v250 = vld [vmem:[%s117 + $0x378] sm:$0xff]
        %v251 = vld [vmem:[%s117 + $0x380] sm:$0xff]
        %v252 = vld [vmem:[%s117 + $0x388] sm:$0xff]
        %v253 = vld [vmem:[%s117 + $0x390] sm:$0xff]
        %v254 = vld [vmem:[%s117 + $0x398] sm:$0xff]
        %v255 = vld [vmem:[%s117 + $0x3a0] sm:$0xff]
        %v256 = vld [vmem:[%s117 + $0x3a8] sm:$0xff]
        %v257 = vld [vmem:[%s117 + $0x3b0] sm:$0xff]
        %v258 = vld [vmem:[%s117 + $0x3b8] sm:$0xff]
        %v259 = vld [vmem:[%s117 + $0x3c0] sm:$0xff]
        %v260 = vld [vmem:[%s117 + $0x3c8] sm:$0xff]
        %v261 = vld [vmem:[%s117 + $0x3d0] sm:$0xff]
        %v262 = vld [vmem:[%s117 + $0x3d8] sm:$0xff]
        %v263 = vld [vmem:[%s117 + $0x3e0] sm:$0xff]
        %v264 = vld [vmem:[%s117 + $0x3e8] sm:$0xff]
        %v265 = vld [vmem:[%s117 + $0x3f0] sm:$0xff]
        %v266 = vld [vmem:[%s117 + $0x3f8] sm:$0xff]
        %v267 = vld [vmem:[%s117 + $0x400] sm:$0xff]
        %v268 = vld [vmem:[%s117 + $0x408] sm:$0xff]
        %v269 = vld [vmem:[%s117 + $0x410] sm:$0xff]
        %v270 = vld [vmem:[%s117 + $0x418] sm:$0xff]
        %v271 = vld [vmem:[%s117 + $0x420] sm:$0xff]
        %v272 = vld [vmem:[%s117 + $0x428] sm:$0xff]
        %v273 = vld [vmem:[%s117 + $0x430] sm:$0xff]
        %v274 = vld [vmem:[%s117 + $0x438] sm:$0xff]
        %v275 = vld [vmem:[%s117 + $0x440] sm:$0xff]
        %v276 = vld [vmem:[%s117 + $0x448] sm:$0xff]
        %v277 = vld [vmem:[%s117 + $0x450] sm:$0xff]
        %v278 = vld [vmem:[%s117 + $0x458] sm:$0xff]
        %v279 = vld [vmem:[%s117 + $0x460] sm:$0xff]
        %v280 = vld [vmem:[%s117 + $0x468] sm:$0xff]
        %v281 = vld [vmem:[%s117 + $0x470] sm:$0xff]
        %v282 = vld [vmem:[%s117 + $0x478] sm:$0xff]
        %v283 = vld [vmem:[%s117 + $0x480] sm:$0xff]
        %v284 = vld [vmem:[%s117 + $0x488] sm:$0xff]
        %v285 = vld [vmem:[%s117 + $0x490] sm:$0xff]
        %v286 = vld [vmem:[%s117 + $0x498] sm:$0xff]
        %v287 = vld [vmem:[%s117 + $0x4a0] sm:$0xff]
        %v288 = vld [vmem:[%s117 + $0x4a8] sm:$0xff]
        %v289 = vld [vmem:[%s117 + $0x4b0] sm:$0xff]
        %v290 = vld [vmem:[%s117 + $0x4b8] sm:$0xff]
        %v291 = vld [vmem:[%s117 + $0x4c0] sm:$0xff]
        %v292 = vld [vmem:[%s117 + $0x4c8] sm:$0xff]
        %v293 = vld [vmem:[%s117 + $0x4d0] sm:$0xff]
        %v294 = vld [vmem:[%s117 + $0x4d8] sm:$0xff]
        %v295 = vld [vmem:[%s117 + $0x4e0] sm:$0xff]
        %v296 = vld [vmem:[%s117 + $0x4e8] sm:$0xff]
        %v297 = vld [vmem:[%s117 + $0x4f0] sm:$0xff]
        %v298 = vld [vmem:[%s117 + $0x4f8] sm:$0xff]
        %v299 = vld [vmem:[%s117 + $0x500] sm:$0xff]
        %v300 = vld [vmem:[%s117 + $0x508] sm:$0xff]
        %v301 = vld [vmem:[%s117 + $0x510] sm:$0xff]
        %v302 = vld [vmem:[%s117 + $0x518] sm:$0xff]
        %v303 = vld [vmem:[%s117 + $0x520] sm:$0xff]
        %v304 = vld [vmem:[%s117 + $0x528] sm:$0xff]
        %v305 = vld [vmem:[%s117 + $0x530] sm:$0xff]
        %v306 = vld [vmem:[%s117 + $0x538] sm:$0xff]
        %v307 = vld [vmem:[%s117 + $0x540] sm:$0xff]
        %v308 = vld [vmem:[%s117 + $0x548] sm:$0xff]
        %v309 = vld [vmem:[%s117 + $0x550] sm:$0xff]
        %v310 = vld [vmem:[%s117 + $0x558] sm:$0xff]
        %v311 = vld [vmem:[%s117 + $0x560] sm:$0xff]
        %v312 = vld [vmem:[%s117 + $0x568] sm:$0xff]
        %v313 = vld [vmem:[%s117 + $0x570] sm:$0xff]
        %v314 = vld [vmem:[%s117 + $0x578] sm:$0xff]
        %v315 = vld [vmem:[%s117 + $0x580] sm:$0xff]
        %v316 = vld [vmem:[%s117 + $0x588] sm:$0xff]
        %v317 = vld [vmem:[%s117 + $0x590] sm:$0xff]
        %v318 = vld [vmem:[%s117 + $0x598] sm:$0xff]
        %v319 = vld [vmem:[%s117 + $0x5a0] sm:$0xff]
        %v320 = vld [vmem:[%s117 + $0x5a8] sm:$0xff]
        %v321 = vld [vmem:[%s117 + $0x5b0] sm:$0xff]
        %v322 = vld [vmem:[%s117 + $0x5b8] sm:$0xff]
        %v323 = vld [vmem:[%s117 + $0x5c0] sm:$0xff]
        %v324 = vld [vmem:[%s117 + $0x5c8] sm:$0xff]
        %v325 = vld [vmem:[%s117 + $0x5d0] sm:$0xff]
        %v326 = vld [vmem:[%s117 + $0x5d8] sm:$0xff]
        %v327 = vld [vmem:[%s117 + $0x5e0] sm:$0xff]
        %v328 = vld [vmem:[%s117 + $0x5e8] sm:$0xff]
        %v329 = vld [vmem:[%s117 + $0x5f0] sm:$0xff]
        %v330 = vld [vmem:[%s117 + $0x5f8] sm:$0xff]
        %v331 = vld [vmem:[%s117 + $0x600] sm:$0xff]
        %v332 = vld [vmem:[%s117 + $0x608] sm:$0xff]
        %v333 = vld [vmem:[%s117 + $0x610] sm:$0xff]
        %v334 = vld [vmem:[%s117 + $0x618] sm:$0xff]
        %v335 = vld [vmem:[%s117 + $0x620] sm:$0xff]
        %v336 = vld [vmem:[%s117 + $0x628] sm:$0xff]
        %v337 = vld [vmem:[%s117 + $0x630] sm:$0xff]
        %v338 = vld [vmem:[%s117 + $0x638] sm:$0xff]
        %v339 = vld [vmem:[%s117 + $0x640] sm:$0xff]
        %v340 = vld [vmem:[%s117 + $0x648] sm:$0xff]
        %v341 = vld [vmem:[%s117 + $0x650] sm:$0xff]
        %v342 = vld [vmem:[%s117 + $0x658] sm:$0xff]
        %v343 = vld [vmem:[%s117 + $0x660] sm:$0xff]
        %v344 = vld [vmem:[%s117 + $0x668] sm:$0xff]
        %v345 = vld [vmem:[%s117 + $0x670] sm:$0xff]
        %v346 = vld [vmem:[%s117 + $0x678] sm:$0xff]
        %v347 = vld [vmem:[%s117 + $0x680] sm:$0xff]
        %v348 = vld [vmem:[%s117 + $0x688] sm:$0xff]
        %v349 = vld [vmem:[%s117 + $0x690] sm:$0xff]
        %v350 = vld [vmem:[%s117 + $0x698] sm:$0xff]
        %v351 = vld [vmem:[%s117 + $0x6a0] sm:$0xff]
        %v352 = vld [vmem:[%s117 + $0x6a8] sm:$0xff]
        %v353 = vld [vmem:[%s117 + $0x6b0] sm:$0xff]
        %v354 = vld [vmem:[%s117 + $0x6b8] sm:$0xff]
        %v355 = vld [vmem:[%s117 + $0x6c0] sm:$0xff]
        %v356 = vld [vmem:[%s117 + $0x6c8] sm:$0xff]
        %v357 = vld [vmem:[%s117 + $0x6d0] sm:$0xff]
        %v358 = vld [vmem:[%s117 + $0x6d8] sm:$0xff]
        %v359 = vld [vmem:[%s117 + $0x6e0] sm:$0xff]
        %v360 = vld [vmem:[%s117 + $0x6e8] sm:$0xff]
        %v361 = vld [vmem:[%s117 + $0x6f0] sm:$0xff]
        %v362 = vld [vmem:[%s117 + $0x6f8] sm:$0xff]
        %v363 = vld [vmem:[%s117 + $0x700] sm:$0xff]
        %v364 = vld [vmem:[%s117 + $0x708] sm:$0xff]
        %v365 = vld [vmem:[%s117 + $0x710] sm:$0xff]
        %v366 = vld [vmem:[%s117 + $0x718] sm:$0xff]
        %v367 = vld [vmem:[%s117 + $0x720] sm:$0xff]
        %v368 = vld [vmem:[%s117 + $0x728] sm:$0xff]
        %v369 = vld [vmem:[%s117 + $0x730] sm:$0xff]
        %v370 = vld [vmem:[%s117 + $0x738] sm:$0xff]
        %v371 = vld [vmem:[%s117 + $0x740] sm:$0xff]
        %v372 = vld [vmem:[%s117 + $0x748] sm:$0xff]
        %v373 = vld [vmem:[%s117 + $0x750] sm:$0xff]
        %v374 = vld [vmem:[%s117 + $0x758] sm:$0xff]
        %v375 = vld [vmem:[%s117 + $0x760] sm:$0xff]
        %v376 = vld [vmem:[%s117 + $0x768] sm:$0xff]
        %v377 = vld [vmem:[%s117 + $0x770] sm:$0xff]
        %v378 = vld [vmem:[%s117 + $0x778] sm:$0xff]
        %v379 = vld [vmem:[%s117 + $0x780] sm:$0xff]
        %v380 = vld [vmem:[%s117 + $0x788] sm:$0xff]
        %v381 = vld [vmem:[%s117 + $0x790] sm:$0xff]
        %v382 = vld [vmem:[%s117 + $0x798] sm:$0xff]
        %v383 = vld [vmem:[%s117 + $0x7a0] sm:$0xff]
        %v384 = vld [vmem:[%s117 + $0x7a8] sm:$0xff]
        %v385 = vld [vmem:[%s117 + $0x7b0] sm:$0xff]
        %v386 = vld [vmem:[%s117 + $0x7b8] sm:$0xff]
        %v387 = vld [vmem:[%s117 + $0x7c0] sm:$0xff]
        %v388 = vld [vmem:[%s117 + $0x7c8] sm:$0xff]
        %v389 = vld [vmem:[%s117 + $0x7d0] sm:$0xff]
        %v390 = vld [vmem:[%s117 + $0x7d8] sm:$0xff]
        %v391 = vld [vmem:[%s117 + $0x7e0] sm:$0xff]
        %v392 = vld [vmem:[%s117 + $0x7e8] sm:$0xff]
        %v393 = vld [vmem:[%s117 + $0x7f0] sm:$0xff]
        %v394 = vld [vmem:[%s117 + $0x7f8] sm:$0xff]
        %v395 = vadd.f32 %v139, 3.0
        %v396 = vadd.f32 %v140, 3.0
        %v397 = vadd.f32 %v141, 3.0
        %v398 = vadd.f32 %v142, 3.0
        %v399 = vadd.f32 %v143, 3.0
        %v400 = vadd.f32 %v144, 3.0
        %v401 = vadd.f32 %v145, 3.0
        %v402 = vadd.f32 %v146, 3.0
        %v403 = vadd.f32 %v147, 3.0
        %v404 = vadd.f32 %v148, 3.0
        %v405 = vadd.f32 %v149, 3.0
        %v406 = vadd.f32 %v150, 3.0
        %v407 = vadd.f32 %v151, 3.0
        %v408 = vadd.f32 %v152, 3.0
        %v409 = vadd.f32 %v153, 3.0
        %v410 = vadd.f32 %v154, 3.0
        %v411 = vadd.f32 %v155, 3.0
        %v412 = vadd.f32 %v156, 3.0
        %v413 = vadd.f32 %v157, 3.0
        %v414 = vadd.f32 %v158, 3.0
        %v415 = vadd.f32 %v159, 3.0
        %v416 = vadd.f32 %v160, 3.0
        %v417 = vadd.f32 %v161, 3.0
        %v418 = vadd.f32 %v162, 3.0
        %v419 = vadd.f32 %v163, 3.0
        %v420 = vadd.f32 %v164, 3.0
        %v421 = vadd.f32 %v165, 3.0
        %v422 = vadd.f32 %v166, 3.0
        %v423 = vadd.f32 %v167, 3.0
        %v424 = vadd.f32 %v168, 3.0
        %v425 = vadd.f32 %v169, 3.0
        %v426 = vadd.f32 %v170, 3.0
        %v427 = vadd.f32 %v171, 3.0
        %v428 = vadd.f32 %v172, 3.0
        %v429 = vadd.f32 %v173, 3.0
        %v430 = vadd.f32 %v174, 3.0
        %v431 = vadd.f32 %v175, 3.0
        %v432 = vadd.f32 %v176, 3.0
        %v433 = vadd.f32 %v177, 3.0
        %v434 = vadd.f32 %v178, 3.0
        %v435 = vadd.f32 %v179, 3.0
        %v436 = vadd.f32 %v180, 3.0
        %v437 = vadd.f32 %v181, 3.0
        %v438 = vadd.f32 %v182, 3.0
        %v439 = vadd.f32 %v183, 3.0
        %v440 = vadd.f32 %v184, 3.0
        %v441 = vadd.f32 %v185, 3.0
        %v442 = vadd.f32 %v186, 3.0
        %v443 = vadd.f32 %v187, 3.0
        %v444 = vadd.f32 %v188, 3.0
        %v445 = vadd.f32 %v189, 3.0
        %v446 = vadd.f32 %v190, 3.0
        %v447 = vadd.f32 %v191, 3.0
        %v448 = vadd.f32 %v192, 3.0
        %v449 = vadd.f32 %v193, 3.0
        %v450 = vadd.f32 %v194, 3.0
        %v451 = vadd.f32 %v195, 3.0
        %v452 = vadd.f32 %v196, 3.0
        %v453 = vadd.f32 %v197, 3.0
        %v454 = vadd.f32 %v198, 3.0
        %v455 = vadd.f32 %v199, 3.0
        %v456 = vadd.f32 %v200, 3.0
        %v457 = vadd.f32 %v201, 3.0
        %v458 = vadd.f32 %v202, 3.0
        %v459 = vadd.f32 %v203, 3.0
        %v460 = vadd.f32 %v204, 3.0
        %v461 = vadd.f32 %v205, 3.0
        %v462 = vadd.f32 %v206, 3.0
        %v463 = vadd.f32 %v207, 3.0
        %v464 = vadd.f32 %v208, 3.0
        %v465 = vadd.f32 %v209, 3.0
        %v466 = vadd.f32 %v210, 3.0
        %v467 = vadd.f32 %v211, 3.0
        %v468 = vadd.f32 %v212, 3.0
        %v469 = vadd.f32 %v213, 3.0
        %v470 = vadd.f32 %v214, 3.0
        %v471 = vadd.f32 %v215, 3.0
        %v472 = vadd.f32 %v216, 3.0
        %v473 = vadd.f32 %v217, 3.0
        %v474 = vadd.f32 %v218, 3.0
        %v475 = vadd.f32 %v219, 3.0
        %v476 = vadd.f32 %v220, 3.0
        %v477 = vadd.f32 %v221, 3.0
        %v478 = vadd.f32 %v222, 3.0
        %v479 = vadd.f32 %v223, 3.0
        %v480 = vadd.f32 %v224, 3.0
        %v481 = vadd.f32 %v225, 3.0
        %v482 = vadd.f32 %v226, 3.0
        %v483 = vadd.f32 %v227, 3.0
        %v484 = vadd.f32 %v228, 3.0
        %v485 = vadd.f32 %v229, 3.0
        %v486 = vadd.f32 %v230, 3.0
        %v487 = vadd.f32 %v231, 3.0
        %v488 = vadd.f32 %v232, 3.0
        %v489 = vadd.f32 %v233, 3.0
        %v490 = vadd.f32 %v234, 3.0
        %v491 = vadd.f32 %v235, 3.0
        %v492 = vadd.f32 %v236, 3.0
        %v493 = vadd.f32 %v237, 3.0
        %v494 = vadd.f32 %v238, 3.0
        %v495 = vadd.f32 %v239, 3.0
        %v496 = vadd.f32 %v240, 3.0
        %v497 = vadd.f32 %v241, 3.0
        %v498 = vadd.f32 %v242, 3.0
        %v499 = vadd.f32 %v243, 3.0
        %v500 = vadd.f32 %v244, 3.0
        %v501 = vadd.f32 %v245, 3.0
        %v502 = vadd.f32 %v246, 3.0
        %v503 = vadd.f32 %v247, 3.0
        %v504 = vadd.f32 %v248, 3.0
        %v505 = vadd.f32 %v249, 3.0
        %v506 = vadd.f32 %v250, 3.0
        %v507 = vadd.f32 %v251, 3.0
        %v508 = vadd.f32 %v252, 3.0
        %v509 = vadd.f32 %v253, 3.0
        %v510 = vadd.f32 %v254, 3.0
        %v511 = vadd.f32 %v255, 3.0
        %v512 = vadd.f32 %v256, 3.0
        %v513 = vadd.f32 %v257, 3.0
        %v514 = vadd.f32 %v258, 3.0
        %v515 = vadd.f32 %v259, 3.0
        %v516 = vadd.f32 %v260, 3.0
        %v517 = vadd.f32 %v261, 3.0
        %v518 = vadd.f32 %v262, 3.0
        %v519 = vadd.f32 %v263, 3.0
        %v520 = vadd.f32 %v264, 3.0
        %v521 = vadd.f32 %v265, 3.0
        %v522 = vadd.f32 %v266, 3.0
        %v523 = vadd.f32 %v267, 3.0
        %v524 = vadd.f32 %v268, 3.0
        %v525 = vadd.f32 %v269, 3.0
        %v526 = vadd.f32 %v270, 3.0
        %v527 = vadd.f32 %v271, 3.0
        %v528 = vadd.f32 %v272, 3.0
        %v529 = vadd.f32 %v273, 3.0
        %v530 = vadd.f32 %v274, 3.0
        %v531 = vadd.f32 %v275, 3.0
        %v532 = vadd.f32 %v276, 3.0
        %v533 = vadd.f32 %v277, 3.0
        %v534 = vadd.f32 %v278, 3.0
        %v535 = vadd.f32 %v279, 3.0
        %v536 = vadd.f32 %v280, 3.0
        %v537 = vadd.f32 %v281, 3.0
        %v538 = vadd.f32 %v282, 3.0
        %v539 = vadd.f32 %v283, 3.0
        %v540 = vadd.f32 %v284, 3.0
        %v541 = vadd.f32 %v285, 3.0
        %v542 = vadd.f32 %v286, 3.0
        %v543 = vadd.f32 %v287, 3.0
        %v544 = vadd.f32 %v288, 3.0
        %v545 = vadd.f32 %v289, 3.0
        %v546 = vadd.f32 %v290, 3.0
        %v547 = vadd.f32 %v291, 3.0
        %v548 = vadd.f32 %v292, 3.0
        %v549 = vadd.f32 %v293, 3.0
        %v550 = vadd.f32 %v294, 3.0
        %v551 = vadd.f32 %v295, 3.0
        %v552 = vadd.f32 %v296, 3.0
        %v553 = vadd.f32 %v297, 3.0
        %v554 = vadd.f32 %v298, 3.0
        %v555 = vadd.f32 %v299, 3.0
        %v556 = vadd.f32 %v300, 3.0
        %v557 = vadd.f32 %v301, 3.0
        %v558 = vadd.f32 %v302, 3.0
        %v559 = vadd.f32 %v303, 3.0
        %v560 = vadd.f32 %v304, 3.0
        %v561 = vadd.f32 %v305, 3.0
        %v562 = vadd.f32 %v306, 3.0
        %v563 = vadd.f32 %v307, 3.0
        %v564 = vadd.f32 %v308, 3.0
        %v565 = vadd.f32 %v309, 3.0
        %v566 = vadd.f32 %v310, 3.0
        %v567 = vadd.f32 %v311, 3.0
        %v568 = vadd.f32 %v312, 3.0
        %v569 = vadd.f32 %v313, 3.0
        %v570 = vadd.f32 %v314, 3.0
        %v571 = vadd.f32 %v315, 3.0
        %v572 = vadd.f32 %v316, 3.0
        %v573 = vadd.f32 %v317, 3.0
        %v574 = vadd.f32 %v318, 3.0
        %v575 = vadd.f32 %v319, 3.0
        %v576 = vadd.f32 %v320, 3.0
        %v577 = vadd.f32 %v321, 3.0
        %v578 = vadd.f32 %v322, 3.0
        %v579 = vadd.f32 %v323, 3.0
        %v580 = vadd.f32 %v324, 3.0
        %v581 = vadd.f32 %v325, 3.0
        %v582 = vadd.f32 %v326, 3.0
        %v583 = vadd.f32 %v327, 3.0
        %v584 = vadd.f32 %v328, 3.0
        %v585 = vadd.f32 %v329, 3.0
        %v586 = vadd.f32 %v330, 3.0
        %v587 = vadd.f32 %v331, 3.0
        %v588 = vadd.f32 %v332, 3.0
        %v589 = vadd.f32 %v333, 3.0
        %v590 = vadd.f32 %v334, 3.0
        %v591 = vadd.f32 %v335, 3.0
        %v592 = vadd.f32 %v336, 3.0
        %v593 = vadd.f32 %v337, 3.0
        %v594 = vadd.f32 %v338, 3.0
        %v595 = vadd.f32 %v339, 3.0
        %v596 = vadd.f32 %v340, 3.0
        %v597 = vadd.f32 %v341, 3.0
        %v598 = vadd.f32 %v342, 3.0
        %v599 = vadd.f32 %v343, 3.0
        %v600 = vadd.f32 %v344, 3.0
        %v601 = vadd.f32 %v345, 3.0
        %v602 = vadd.f32 %v346, 3.0
        %v603 = vadd.f32 %v347, 3.0
        %v604 = vadd.f32 %v348, 3.0
        %v605 = vadd.f32 %v349, 3.0
        %v606 = vadd.f32 %v350, 3.0
        %v607 = vadd.f32 %v351, 3.0
        %v608 = vadd.f32 %v352, 3.0
        %v609 = vadd.f32 %v353, 3.0
        %v610 = vadd.f32 %v354, 3.0
        %v611 = vadd.f32 %v355, 3.0
        %v612 = vadd.f32 %v356, 3.0
        %v613 = vadd.f32 %v357, 3.0
        %v614 = vadd.f32 %v358, 3.0
        %v615 = vadd.f32 %v359, 3.0
        %v616 = vadd.f32 %v360, 3.0
        %v617 = vadd.f32 %v361, 3.0
        %v618 = vadd.f32 %v362, 3.0
        %v619 = vadd.f32 %v363, 3.0
        %v620 = vadd.f32 %v364, 3.0
        %v621 = vadd.f32 %v365, 3.0
        %v622 = vadd.f32 %v366, 3.0
        %v623 = vadd.f32 %v367, 3.0
        %v624 = vadd.f32 %v368, 3.0
        %v625 = vadd.f32 %v369, 3.0
        %v626 = vadd.f32 %v370, 3.0
        %v627 = vadd.f32 %v371, 3.0
        %v628 = vadd.f32 %v372, 3.0
        %v629 = vadd.f32 %v373, 3.0
        %v630 = vadd.f32 %v374, 3.0
        %v631 = vadd.f32 %v375, 3.0
        %v632 = vadd.f32 %v376, 3.0
        %v633 = vadd.f32 %v377, 3.0
        %v634 = vadd.f32 %v378, 3.0
        %v635 = vadd.f32 %v379, 3.0
        %v636 = vadd.f32 %v380, 3.0
        %v637 = vadd.f32 %v381, 3.0
        %v638 = vadd.f32 %v382, 3.0
        %v639 = vadd.f32 %v383, 3.0
        %v640 = vadd.f32 %v384, 3.0
        %v641 = vadd.f32 %v385, 3.0
        %v642 = vadd.f32 %v386, 3.0
        %v643 = vadd.f32 %v387, 3.0
        %v644 = vadd.f32 %v388, 3.0
        %v645 = vadd.f32 %v389, 3.0
        %v646 = vadd.f32 %v390, 3.0
        %v647 = vadd.f32 %v391, 3.0
        %v648 = vadd.f32 %v392, 3.0
        %v649 = vadd.f32 %v393, 3.0
        %v650 = vadd.f32 %v394, 3.0
        %v651 = vmax.f32 %v395, 0.0
        %v652 = vmax.f32 %v396, 0.0
        %v653 = vmax.f32 %v397, 0.0
        %v654 = vmax.f32 %v398, 0.0
        %v655 = vmax.f32 %v399, 0.0
        %v656 = vmax.f32 %v400, 0.0
        %v657 = vmax.f32 %v401, 0.0
        %v658 = vmax.f32 %v402, 0.0
        %v659 = vmax.f32 %v403, 0.0
        %v660 = vmax.f32 %v404, 0.0
        %v661 = vmax.f32 %v405, 0.0
        %v662 = vmax.f32 %v406, 0.0
        %v663 = vmax.f32 %v407, 0.0
        %v664 = vmax.f32 %v408, 0.0
        %v665 = vmax.f32 %v409, 0.0
        %v666 = vmax.f32 %v410, 0.0
        %v667 = vmax.f32 %v411, 0.0
        %v668 = vmax.f32 %v412, 0.0
        %v669 = vmax.f32 %v413, 0.0
        %v670 = vmax.f32 %v414, 0.0
        %v671 = vmax.f32 %v415, 0.0
        %v672 = vmax.f32 %v416, 0.0
        %v673 = vmax.f32 %v417, 0.0
        %v674 = vmax.f32 %v418, 0.0
        %v675 = vmax.f32 %v419, 0.0
        %v676 = vmax.f32 %v420, 0.0
        %v677 = vmax.f32 %v421, 0.0
        %v678 = vmax.f32 %v422, 0.0
        %v679 = vmax.f32 %v423, 0.0
        %v680 = vmax.f32 %v424, 0.0
        %v681 = vmax.f32 %v425, 0.0
        %v682 = vmax.f32 %v426, 0.0
        %v683 = vmax.f32 %v427, 0.0
        %v684 = vmax.f32 %v428, 0.0
        %v685 = vmax.f32 %v429, 0.0
        %v686 = vmax.f32 %v430, 0.0
        %v687 = vmax.f32 %v431, 0.0
        %v688 = vmax.f32 %v432, 0.0
        %v689 = vmax.f32 %v433, 0.0
        %v690 = vmax.f32 %v434, 0.0
        %v691 = vmax.f32 %v435, 0.0
        %v692 = vmax.f32 %v436, 0.0
        %v693 = vmax.f32 %v437, 0.0
        %v694 = vmax.f32 %v438, 0.0
        %v695 = vmax.f32 %v439, 0.0
        %v696 = vmax.f32 %v440, 0.0
        %v697 = vmax.f32 %v441, 0.0
        %v698 = vmax.f32 %v442, 0.0
        %v699 = vmax.f32 %v443, 0.0
        %v700 = vmax.f32 %v444, 0.0
        %v701 = vmax.f32 %v445, 0.0
        %v702 = vmax.f32 %v446, 0.0
        %v703 = vmax.f32 %v447, 0.0
        %v704 = vmax.f32 %v448, 0.0
        %v705 = vmax.f32 %v449, 0.0
        %v706 = vmax.f32 %v450, 0.0
        %v707 = vmax.f32 %v451, 0.0
        %v708 = vmax.f32 %v452, 0.0
        %v709 = vmax.f32 %v453, 0.0
        %v710 = vmax.f32 %v454, 0.0
        %v711 = vmax.f32 %v455, 0.0
        %v712 = vmax.f32 %v456, 0.0
        %v713 = vmax.f32 %v457, 0.0
        %v714 = vmax.f32 %v458, 0.0
        %v715 = vmax.f32 %v459, 0.0
        %v716 = vmax.f32 %v460, 0.0
        %v717 = vmax.f32 %v461, 0.0
        %v718 = vmax.f32 %v462, 0.0
        %v719 = vmax.f32 %v463, 0.0
        %v720 = vmax.f32 %v464, 0.0
        %v721 = vmax.f32 %v465, 0.0
        %v722 = vmax.f32 %v466, 0.0
        %v723 = vmax.f32 %v467, 0.0
        %v724 = vmax.f32 %v468, 0.0
        %v725 = vmax.f32 %v469, 0.0
        %v726 = vmax.f32 %v470, 0.0
        %v727 = vmax.f32 %v471, 0.0
        %v728 = vmax.f32 %v472, 0.0
        %v729 = vmax.f32 %v473, 0.0
        %v730 = vmax.f32 %v474, 0.0
        %v731 = vmax.f32 %v475, 0.0
        %v732 = vmax.f32 %v476, 0.0
        %v733 = vmax.f32 %v477, 0.0
        %v734 = vmax.f32 %v478, 0.0
        %v735 = vmax.f32 %v479, 0.0
        %v736 = vmax.f32 %v480, 0.0
        %v737 = vmax.f32 %v481, 0.0
        %v738 = vmax.f32 %v482, 0.0
        %v739 = vmax.f32 %v483, 0.0
        %v740 = vmax.f32 %v484, 0.0
        %v741 = vmax.f32 %v485, 0.0
        %v742 = vmax.f32 %v486, 0.0
        %v743 = vmax.f32 %v487, 0.0
        %v744 = vmax.f32 %v488, 0.0
        %v745 = vmax.f32 %v489, 0.0
        %v746 = vmax.f32 %v490, 0.0
        %v747 = vmax.f32 %v491, 0.0
        %v748 = vmax.f32 %v492, 0.0
        %v749 = vmax.f32 %v493, 0.0
        %v750 = vmax.f32 %v494, 0.0
        %v751 = vmax.f32 %v495, 0.0
        %v752 = vmax.f32 %v496, 0.0
        %v753 = vmax.f32 %v497, 0.0
        %v754 = vmax.f32 %v498, 0.0
        %v755 = vmax.f32 %v499, 0.0
        %v756 = vmax.f32 %v500, 0.0
        %v757 = vmax.f32 %v501, 0.0
        %v758 = vmax.f32 %v502, 0.0
        %v759 = vmax.f32 %v503, 0.0
        %v760 = vmax.f32 %v504, 0.0
        %v761 = vmax.f32 %v505, 0.0
        %v762 = vmax.f32 %v506, 0.0
        %v763 = vmax.f32 %v507, 0.0
        %v764 = vmax.f32 %v508, 0.0
        %v765 = vmax.f32 %v509, 0.0
        %v766 = vmax.f32 %v510, 0.0
        %v767 = vmax.f32 %v511, 0.0
        %v768 = vmax.f32 %v512, 0.0
        %v769 = vmax.f32 %v513, 0.0
        %v770 = vmax.f32 %v514, 0.0
        %v771 = vmax.f32 %v515, 0.0
        %v772 = vmax.f32 %v516, 0.0
        %v773 = vmax.f32 %v517, 0.0
        %v774 = vmax.f32 %v518, 0.0
        %v775 = vmax.f32 %v519, 0.0
        %v776 = vmax.f32 %v520, 0.0
        %v777 = vmax.f32 %v521, 0.0
        %v778 = vmax.f32 %v522, 0.0
        %v779 = vmax.f32 %v523, 0.0
        %v780 = vmax.f32 %v524, 0.0
        %v781 = vmax.f32 %v525, 0.0
        %v782 = vmax.f32 %v526, 0.0
        %v783 = vmax.f32 %v527, 0.0
        %v784 = vmax.f32 %v528, 0.0
        %v785 = vmax.f32 %v529, 0.0
        %v786 = vmax.f32 %v530, 0.0
        %v787 = vmax.f32 %v531, 0.0
        %v788 = vmax.f32 %v532, 0.0
        %v789 = vmax.f32 %v533, 0.0
        %v790 = vmax.f32 %v534, 0.0
        %v791 = vmax.f32 %v535, 0.0
        %v792 = vmax.f32 %v536, 0.0
        %v793 = vmax.f32 %v537, 0.0
        %v794 = vmax.f32 %v538, 0.0
        %v795 = vmax.f32 %v539, 0.0
        %v796 = vmax.f32 %v540, 0.0
        %v797 = vmax.f32 %v541, 0.0
        %v798 = vmax.f32 %v542, 0.0
        %v799 = vmax.f32 %v543, 0.0
        %v800 = vmax.f32 %v544, 0.0
        %v801 = vmax.f32 %v545, 0.0
        %v802 = vmax.f32 %v546, 0.0
        %v803 = vmax.f32 %v547, 0.0
        %v804 = vmax.f32 %v548, 0.0
        %v805 = vmax.f32 %v549, 0.0
        %v806 = vmax.f32 %v550, 0.0
        %v807 = vmax.f32 %v551, 0.0
        %v808 = vmax.f32 %v552, 0.0
        %v809 = vmax.f32 %v553, 0.0
        %v810 = vmax.f32 %v554, 0.0
        %v811 = vmax.f32 %v555, 0.0
        %v812 = vmax.f32 %v556, 0.0
        %v813 = vmax.f32 %v557, 0.0
        %v814 = vmax.f32 %v558, 0.0
        %v815 = vmax.f32 %v559, 0.0
        %v816 = vmax.f32 %v560, 0.0
        %v817 = vmax.f32 %v561, 0.0
        %v818 = vmax.f32 %v562, 0.0
        %v819 = vmax.f32 %v563, 0.0
        %v820 = vmax.f32 %v564, 0.0
        %v821 = vmax.f32 %v565, 0.0
        %v822 = vmax.f32 %v566, 0.0
        %v823 = vmax.f32 %v567, 0.0
        %v824 = vmax.f32 %v568, 0.0
        %v825 = vmax.f32 %v569, 0.0
        %v826 = vmax.f32 %v570, 0.0
        %v827 = vmax.f32 %v571, 0.0
        %v828 = vmax.f32 %v572, 0.0
        %v829 = vmax.f32 %v573, 0.0
        %v830 = vmax.f32 %v574, 0.0
        %v831 = vmax.f32 %v575, 0.0
        %v832 = vmax.f32 %v576, 0.0
        %v833 = vmax.f32 %v577, 0.0
        %v834 = vmax.f32 %v578, 0.0
        %v835 = vmax.f32 %v579, 0.0
        %v836 = vmax.f32 %v580, 0.0
        %v837 = vmax.f32 %v581, 0.0
        %v838 = vmax.f32 %v582, 0.0
        %v839 = vmax.f32 %v583, 0.0
        %v840 = vmax.f32 %v584, 0.0
        %v841 = vmax.f32 %v585, 0.0
        %v842 = vmax.f32 %v586, 0.0
        %v843 = vmax.f32 %v587, 0.0
        %v844 = vmax.f32 %v588, 0.0
        %v845 = vmax.f32 %v589, 0.0
        %v846 = vmax.f32 %v590, 0.0
        %v847 = vmax.f32 %v591, 0.0
        %v848 = vmax.f32 %v592, 0.0
        %v849 = vmax.f32 %v593, 0.0
        %v850 = vmax.f32 %v594, 0.0
        %v851 = vmax.f32 %v595, 0.0
        %v852 = vmax.f32 %v596, 0.0
        %v853 = vmax.f32 %v597, 0.0
        %v854 = vmax.f32 %v598, 0.0
        %v855 = vmax.f32 %v599, 0.0
        %v856 = vmax.f32 %v600, 0.0
        %v857 = vmax.f32 %v601, 0.0
        %v858 = vmax.f32 %v602, 0.0
        %v859 = vmax.f32 %v603, 0.0
        %v860 = vmax.f32 %v604, 0.0
        %v861 = vmax.f32 %v605, 0.0
        %v862 = vmax.f32 %v606, 0.0
        %v863 = vmax.f32 %v607, 0.0
        %v864 = vmax.f32 %v608, 0.0
        %v865 = vmax.f32 %v609, 0.0
        %v866 = vmax.f32 %v610, 0.0
        %v867 = vmax.f32 %v611, 0.0
        %v868 = vmax.f32 %v612, 0.0
        %v869 = vmax.f32 %v613, 0.0
        %v870 = vmax.f32 %v614, 0.0
        %v871 = vmax.f32 %v615, 0.0
        %v872 = vmax.f32 %v616, 0.0
        %v873 = vmax.f32 %v617, 0.0
        %v874 = vmax.f32 %v618, 0.0
        %v875 = vmax.f32 %v619, 0.0
        %v876 = vmax.f32 %v620, 0.0
        %v877 = vmax.f32 %v621, 0.0
        %v878 = vmax.f32 %v622, 0.0
        %v879 = vmax.f32 %v623, 0.0
        %v880 = vmax.f32 %v624, 0.0
        %v881 = vmax.f32 %v625, 0.0
        %v882 = vmax.f32 %v626, 0.0
        %v883 = vmax.f32 %v627, 0.0
        %v884 = vmax.f32 %v628, 0.0
        %v885 = vmax.f32 %v629, 0.0
        %v886 = vmax.f32 %v630, 0.0
        %v887 = vmax.f32 %v631, 0.0
        %v888 = vmax.f32 %v632, 0.0
        %v889 = vmax.f32 %v633, 0.0
        %v890 = vmax.f32 %v634, 0.0
        %v891 = vmax.f32 %v635, 0.0
        %v892 = vmax.f32 %v636, 0.0
        %v893 = vmax.f32 %v637, 0.0
        %v894 = vmax.f32 %v638, 0.0
        %v895 = vmax.f32 %v639, 0.0
        %v896 = vmax.f32 %v640, 0.0
        %v897 = vmax.f32 %v641, 0.0
        %v898 = vmax.f32 %v642, 0.0
        %v899 = vmax.f32 %v643, 0.0
        %v900 = vmax.f32 %v644, 0.0
        %v901 = vmax.f32 %v645, 0.0
        %v902 = vmax.f32 %v646, 0.0
        %v903 = vmax.f32 %v647, 0.0
        %v904 = vmax.f32 %v648, 0.0
        %v905 = vmax.f32 %v649, 0.0
        %v906 = vmax.f32 %v650, 0.0
        %v907 = vmin.f32 %v651, 6.0
        %v908 = vmin.f32 %v652, 6.0
        %v909 = vmin.f32 %v653, 6.0
        %v910 = vmin.f32 %v654, 6.0
        %v911 = vmin.f32 %v655, 6.0
        %v912 = vmin.f32 %v656, 6.0
        %v913 = vmin.f32 %v657, 6.0
        %v914 = vmin.f32 %v658, 6.0
        %v915 = vmin.f32 %v659, 6.0
        %v916 = vmin.f32 %v660, 6.0
        %v917 = vmin.f32 %v661, 6.0
        %v918 = vmin.f32 %v662, 6.0
        %v919 = vmin.f32 %v663, 6.0
        %v920 = vmin.f32 %v664, 6.0
        %v921 = vmin.f32 %v665, 6.0
        %v922 = vmin.f32 %v666, 6.0
        %v923 = vmin.f32 %v667, 6.0
        %v924 = vmin.f32 %v668, 6.0
        %v925 = vmin.f32 %v669, 6.0
        %v926 = vmin.f32 %v670, 6.0
        %v927 = vmin.f32 %v671, 6.0
        %v928 = vmin.f32 %v672, 6.0
        %v929 = vmin.f32 %v673, 6.0
        %v930 = vmin.f32 %v674, 6.0
        %v931 = vmin.f32 %v675, 6.0
        %v932 = vmin.f32 %v676, 6.0
        %v933 = vmin.f32 %v677, 6.0
        %v934 = vmin.f32 %v678, 6.0
        %v935 = vmin.f32 %v679, 6.0
        %v936 = vmin.f32 %v680, 6.0
        %v937 = vmin.f32 %v681, 6.0
        %v938 = vmin.f32 %v682, 6.0
        %v939 = vmin.f32 %v683, 6.0
        %v940 = vmin.f32 %v684, 6.0
        %v941 = vmin.f32 %v685, 6.0
        %v942 = vmin.f32 %v686, 6.0
        %v943 = vmin.f32 %v687, 6.0
        %v944 = vmin.f32 %v688, 6.0
        %v945 = vmin.f32 %v689, 6.0
        %v946 = vmin.f32 %v690, 6.0
        %v947 = vmin.f32 %v691, 6.0
        %v948 = vmin.f32 %v692, 6.0
        %v949 = vmin.f32 %v693, 6.0
        %v950 = vmin.f32 %v694, 6.0
        %v951 = vmin.f32 %v695, 6.0
        %v952 = vmin.f32 %v696, 6.0
        %v953 = vmin.f32 %v697, 6.0
        %v954 = vmin.f32 %v698, 6.0
        %v955 = vmin.f32 %v699, 6.0
        %v956 = vmin.f32 %v700, 6.0
        %v957 = vmin.f32 %v701, 6.0
        %v958 = vmin.f32 %v702, 6.0
        %v959 = vmin.f32 %v703, 6.0
        %v960 = vmin.f32 %v704, 6.0
        %v961 = vmin.f32 %v705, 6.0
        %v962 = vmin.f32 %v706, 6.0
        %v963 = vmin.f32 %v707, 6.0
        %v964 = vmin.f32 %v708, 6.0
        %v965 = vmin.f32 %v709, 6.0
        %v966 = vmin.f32 %v710, 6.0
        %v967 = vmin.f32 %v711, 6.0
        %v968 = vmin.f32 %v712, 6.0
        %v969 = vmin.f32 %v713, 6.0
        %v970 = vmin.f32 %v714, 6.0
        %v971 = vmin.f32 %v715, 6.0
        %v972 = vmin.f32 %v716, 6.0
        %v973 = vmin.f32 %v717, 6.0
        %v974 = vmin.f32 %v718, 6.0
        %v975 = vmin.f32 %v719, 6.0
        %v976 = vmin.f32 %v720, 6.0
        %v977 = vmin.f32 %v721, 6.0
        %v978 = vmin.f32 %v722, 6.0
        %v979 = vmin.f32 %v723, 6.0
        %v980 = vmin.f32 %v724, 6.0
        %v981 = vmin.f32 %v725, 6.0
        %v982 = vmin.f32 %v726, 6.0
        %v983 = vmin.f32 %v727, 6.0
        %v984 = vmin.f32 %v728, 6.0
        %v985 = vmin.f32 %v729, 6.0
        %v986 = vmin.f32 %v730, 6.0
        %v987 = vmin.f32 %v731, 6.0
        %v988 = vmin.f32 %v732, 6.0
        %v989 = vmin.f32 %v733, 6.0
        %v990 = vmin.f32 %v734, 6.0
        %v991 = vmin.f32 %v735, 6.0
        %v992 = vmin.f32 %v736, 6.0
        %v993 = vmin.f32 %v737, 6.0
        %v994 = vmin.f32 %v738, 6.0
        %v995 = vmin.f32 %v739, 6.0
        %v996 = vmin.f32 %v740, 6.0
        %v997 = vmin.f32 %v741, 6.0
        %v998 = vmin.f32 %v742, 6.0
        %v999 = vmin.f32 %v743, 6.0
        %v1000 = vmin.f32 %v744, 6.0
        %v1001 = vmin.f32 %v745, 6.0
        %v1002 = vmin.f32 %v746, 6.0
        %v1003 = vmin.f32 %v747, 6.0
        %v1004 = vmin.f32 %v748, 6.0
        %v1005 = vmin.f32 %v749, 6.0
        %v1006 = vmin.f32 %v750, 6.0
        %v1007 = vmin.f32 %v751, 6.0
        %v1008 = vmin.f32 %v752, 6.0
        %v1009 = vmin.f32 %v753, 6.0
        %v1010 = vmin.f32 %v754, 6.0
        %v1011 = vmin.f32 %v755, 6.0
        %v1012 = vmin.f32 %v756, 6.0
        %v1013 = vmin.f32 %v757, 6.0
        %v1014 = vmin.f32 %v758, 6.0
        %v1015 = vmin.f32 %v759, 6.0
        %v1016 = vmin.f32 %v760, 6.0
        %v1017 = vmin.f32 %v761, 6.0
        %v1018 = vmin.f32 %v762, 6.0
        %v1019 = vmin.f32 %v763, 6.0
        %v1020 = vmin.f32 %v764, 6.0
        %v1021 = vmin.f32 %v765, 6.0
        %v1022 = vmin.f32 %v766, 6.0
        %v1023 = vmin.f32 %v767, 6.0
        %v1024 = vmin.f32 %v768, 6.0
        %v1025 = vmin.f32 %v769, 6.0
        %v1026 = vmin.f32 %v770, 6.0
        %v1027 = vmin.f32 %v771, 6.0
        %v1028 = vmin.f32 %v772, 6.0
        %v1029 = vmin.f32 %v773, 6.0
        %v1030 = vmin.f32 %v774, 6.0
        %v1031 = vmin.f32 %v775, 6.0
        %v1032 = vmin.f32 %v776, 6.0
        %v1033 = vmin.f32 %v777, 6.0
        %v1034 = vmin.f32 %v778, 6.0
        %v1035 = vmin.f32 %v779, 6.0
        %v1036 = vmin.f32 %v780, 6.0
        %v1037 = vmin.f32 %v781, 6.0
        %v1038 = vmin.f32 %v782, 6.0
        %v1039 = vmin.f32 %v783, 6.0
        %v1040 = vmin.f32 %v784, 6.0
        %v1041 = vmin.f32 %v785, 6.0
        %v1042 = vmin.f32 %v786, 6.0
        %v1043 = vmin.f32 %v787, 6.0
        %v1044 = vmin.f32 %v788, 6.0
        %v1045 = vmin.f32 %v789, 6.0
        %v1046 = vmin.f32 %v790, 6.0
        %v1047 = vmin.f32 %v791, 6.0
        %v1048 = vmin.f32 %v792, 6.0
        %v1049 = vmin.f32 %v793, 6.0
        %v1050 = vmin.f32 %v794, 6.0
        %v1051 = vmin.f32 %v795, 6.0
        %v1052 = vmin.f32 %v796, 6.0
        %v1053 = vmin.f32 %v797, 6.0
        %v1054 = vmin.f32 %v798, 6.0
        %v1055 = vmin.f32 %v799, 6.0
        %v1056 = vmin.f32 %v800, 6.0
        %v1057 = vmin.f32 %v801, 6.0
        %v1058 = vmin.f32 %v802, 6.0
        %v1059 = vmin.f32 %v803, 6.0
        %v1060 = vmin.f32 %v804, 6.0
        %v1061 = vmin.f32 %v805, 6.0
        %v1062 = vmin.f32 %v806, 6.0
        %v1063 = vmin.f32 %v807, 6.0
        %v1064 = vmin.f32 %v808, 6.0
        %v1065 = vmin.f32 %v809, 6.0
        %v1066 = vmin.f32 %v810, 6.0
        %v1067 = vmin.f32 %v811, 6.0
        %v1068 = vmin.f32 %v812, 6.0
        %v1069 = vmin.f32 %v813, 6.0
        %v1070 = vmin.f32 %v814, 6.0
        %v1071 = vmin.f32 %v815, 6.0
        %v1072 = vmin.f32 %v816, 6.0
        %v1073 = vmin.f32 %v817, 6.0
        %v1074 = vmin.f32 %v818, 6.0
        %v1075 = vmin.f32 %v819, 6.0
        %v1076 = vmin.f32 %v820, 6.0
        %v1077 = vmin.f32 %v821, 6.0
        %v1078 = vmin.f32 %v822, 6.0
        %v1079 = vmin.f32 %v823, 6.0
        %v1080 = vmin.f32 %v824, 6.0
        %v1081 = vmin.f32 %v825, 6.0
        %v1082 = vmin.f32 %v826, 6.0
        %v1083 = vmin.f32 %v827, 6.0
        %v1084 = vmin.f32 %v828, 6.0
        %v1085 = vmin.f32 %v829, 6.0
        %v1086 = vmin.f32 %v830, 6.0
        %v1087 = vmin.f32 %v831, 6.0
        %v1088 = vmin.f32 %v832, 6.0
        %v1089 = vmin.f32 %v833, 6.0
        %v1090 = vmin.f32 %v834, 6.0
        %v1091 = vmin.f32 %v835, 6.0
        %v1092 = vmin.f32 %v836, 6.0
        %v1093 = vmin.f32 %v837, 6.0
        %v1094 = vmin.f32 %v838, 6.0
        %v1095 = vmin.f32 %v839, 6.0
        %v1096 = vmin.f32 %v840, 6.0
        %v1097 = vmin.f32 %v841, 6.0
        %v1098 = vmin.f32 %v842, 6.0
        %v1099 = vmin.f32 %v843, 6.0
        %v1100 = vmin.f32 %v844, 6.0
        %v1101 = vmin.f32 %v845, 6.0
        %v1102 = vmin.f32 %v846, 6.0
        %v1103 = vmin.f32 %v847, 6.0
        %v1104 = vmin.f32 %v848, 6.0
        %v1105 = vmin.f32 %v849, 6.0
        %v1106 = vmin.f32 %v850, 6.0
        %v1107 = vmin.f32 %v851, 6.0
        %v1108 = vmin.f32 %v852, 6.0
        %v1109 = vmin.f32 %v853, 6.0
        %v1110 = vmin.f32 %v854, 6.0
        %v1111 = vmin.f32 %v855, 6.0
        %v1112 = vmin.f32 %v856, 6.0
        %v1113 = vmin.f32 %v857, 6.0
        %v1114 = vmin.f32 %v858, 6.0
        %v1115 = vmin.f32 %v859, 6.0
        %v1116 = vmin.f32 %v860, 6.0
        %v1117 = vmin.f32 %v861, 6.0
        %v1118 = vmin.f32 %v862, 6.0
        %v1119 = vmin.f32 %v863, 6.0
        %v1120 = vmin.f32 %v864, 6.0
        %v1121 = vmin.f32 %v865, 6.0
        %v1122 = vmin.f32 %v866, 6.0
        %v1123 = vmin.f32 %v867, 6.0
        %v1124 = vmin.f32 %v868, 6.0
        %v1125 = vmin.f32 %v869, 6.0
        %v1126 = vmin.f32 %v870, 6.0
        %v1127 = vmin.f32 %v871, 6.0
        %v1128 = vmin.f32 %v872, 6.0
        %v1129 = vmin.f32 %v873, 6.0
        %v1130 = vmin.f32 %v874, 6.0
        %v1131 = vmin.f32 %v875, 6.0
        %v1132 = vmin.f32 %v876, 6.0
        %v1133 = vmin.f32 %v877, 6.0
        %v1134 = vmin.f32 %v878, 6.0
        %v1135 = vmin.f32 %v879, 6.0
        %v1136 = vmin.f32 %v880, 6.0
        %v1137 = vmin.f32 %v881, 6.0
        %v1138 = vmin.f32 %v882, 6.0
        %v1139 = vmin.f32 %v883, 6.0
        %v1140 = vmin.f32 %v884, 6.0
        %v1141 = vmin.f32 %v885, 6.0
        %v1142 = vmin.f32 %v886, 6.0
        %v1143 = vmin.f32 %v887, 6.0
        %v1144 = vmin.f32 %v888, 6.0
        %v1145 = vmin.f32 %v889, 6.0
        %v1146 = vmin.f32 %v890, 6.0
        %v1147 = vmin.f32 %v891, 6.0
        %v1148 = vmin.f32 %v892, 6.0
        %v1149 = vmin.f32 %v893, 6.0
        %v1150 = vmin.f32 %v894, 6.0
        %v1151 = vmin.f32 %v895, 6.0
        %v1152 = vmin.f32 %v896, 6.0
        %v1153 = vmin.f32 %v897, 6.0
        %v1154 = vmin.f32 %v898, 6.0
        %v1155 = vmin.f32 %v899, 6.0
        %v1156 = vmin.f32 %v900, 6.0
        %v1157 = vmin.f32 %v901, 6.0
        %v1158 = vmin.f32 %v902, 6.0
        %v1159 = vmin.f32 %v903, 6.0
        %v1160 = vmin.f32 %v904, 6.0
        %v1161 = vmin.f32 %v905, 6.0
        %v1162 = vmin.f32 %v906, 6.0
        %v1163 = vmul.f32 %v907, 0.16666667
        %v1164 = vmul.f32 %v908, 0.16666667
        %v1165 = vmul.f32 %v909, 0.16666667
        %v1166 = vmul.f32 %v910, 0.16666667
        %v1167 = vmul.f32 %v911, 0.16666667
        %v1168 = vmul.f32 %v912, 0.16666667
        %v1169 = vmul.f32 %v913, 0.16666667
        %v1170 = vmul.f32 %v914, 0.16666667
        %v1171 = vmul.f32 %v915, 0.16666667
        %v1172 = vmul.f32 %v916, 0.16666667
        %v1173 = vmul.f32 %v917, 0.16666667
        %v1174 = vmul.f32 %v918, 0.16666667
        %v1175 = vmul.f32 %v919, 0.16666667
        %v1176 = vmul.f32 %v920, 0.16666667
        %v1177 = vmul.f32 %v921, 0.16666667
        %v1178 = vmul.f32 %v922, 0.16666667
        %v1179 = vmul.f32 %v923, 0.16666667
        %v1180 = vmul.f32 %v924, 0.16666667
        %v1181 = vmul.f32 %v925, 0.16666667
        %v1182 = vmul.f32 %v926, 0.16666667
        %v1183 = vmul.f32 %v927, 0.16666667
        %v1184 = vmul.f32 %v928, 0.16666667
        %v1185 = vmul.f32 %v929, 0.16666667
        %v1186 = vmul.f32 %v930, 0.16666667
        %v1187 = vmul.f32 %v931, 0.16666667
        %v1188 = vmul.f32 %v932, 0.16666667
        %v1189 = vmul.f32 %v933, 0.16666667
        %v1190 = vmul.f32 %v934, 0.16666667
        %v1191 = vmul.f32 %v935, 0.16666667
        %v1192 = vmul.f32 %v936, 0.16666667
        %v1193 = vmul.f32 %v937, 0.16666667
        %v1194 = vmul.f32 %v938, 0.16666667
        %v1195 = vmul.f32 %v939, 0.16666667
        %v1196 = vmul.f32 %v940, 0.16666667
        %v1197 = vmul.f32 %v941, 0.16666667
        %v1198 = vmul.f32 %v942, 0.16666667
        %v1199 = vmul.f32 %v943, 0.16666667
        %v1200 = vmul.f32 %v944, 0.16666667
        %v1201 = vmul.f32 %v945, 0.16666667
        %v1202 = vmul.f32 %v946, 0.16666667
        %v1203 = vmul.f32 %v947, 0.16666667
        %v1204 = vmul.f32 %v948, 0.16666667
        %v1205 = vmul.f32 %v949, 0.16666667
        %v1206 = vmul.f32 %v950, 0.16666667
        %v1207 = vmul.f32 %v951, 0.16666667
        %v1208 = vmul.f32 %v952, 0.16666667
        %v1209 = vmul.f32 %v953, 0.16666667
        %v1210 = vmul.f32 %v954, 0.16666667
        %v1211 = vmul.f32 %v955, 0.16666667
        %v1212 = vmul.f32 %v956, 0.16666667
        %v1213 = vmul.f32 %v957, 0.16666667
        %v1214 = vmul.f32 %v958, 0.16666667
        %v1215 = vmul.f32 %v959, 0.16666667
        %v1216 = vmul.f32 %v960, 0.16666667
        %v1217 = vmul.f32 %v961, 0.16666667
        %v1218 = vmul.f32 %v962, 0.16666667
        %v1219 = vmul.f32 %v963, 0.16666667
        %v1220 = vmul.f32 %v964, 0.16666667
        %v1221 = vmul.f32 %v965, 0.16666667
        %v1222 = vmul.f32 %v966, 0.16666667
        %v1223 = vmul.f32 %v967, 0.16666667
        %v1224 = vmul.f32 %v968, 0.16666667
        %v1225 = vmul.f32 %v969, 0.16666667
        %v1226 = vmul.f32 %v970, 0.16666667
        %v1227 = vmul.f32 %v971, 0.16666667
        %v1228 = vmul.f32 %v972, 0.16666667
        %v1229 = vmul.f32 %v973, 0.16666667
        %v1230 = vmul.f32 %v974, 0.16666667
        %v1231 = vmul.f32 %v975, 0.16666667
        %v1232 = vmul.f32 %v976, 0.16666667
        %v1233 = vmul.f32 %v977, 0.16666667
        %v1234 = vmul.f32 %v978, 0.16666667
        %v1235 = vmul.f32 %v979, 0.16666667
        %v1236 = vmul.f32 %v980, 0.16666667
        %v1237 = vmul.f32 %v981, 0.16666667
        %v1238 = vmul.f32 %v982, 0.16666667
        %v1239 = vmul.f32 %v983, 0.16666667
        %v1240 = vmul.f32 %v984, 0.16666667
        %v1241 = vmul.f32 %v985, 0.16666667
        %v1242 = vmul.f32 %v986, 0.16666667
        %v1243 = vmul.f32 %v987, 0.16666667
        %v1244 = vmul.f32 %v988, 0.16666667
        %v1245 = vmul.f32 %v989, 0.16666667
        %v1246 = vmul.f32 %v990, 0.16666667
        %v1247 = vmul.f32 %v991, 0.16666667
        %v1248 = vmul.f32 %v992, 0.16666667
        %v1249 = vmul.f32 %v993, 0.16666667
        %v1250 = vmul.f32 %v994, 0.16666667
        %v1251 = vmul.f32 %v995, 0.16666667
        %v1252 = vmul.f32 %v996, 0.16666667
        %v1253 = vmul.f32 %v997, 0.16666667
        %v1254 = vmul.f32 %v998, 0.16666667
        %v1255 = vmul.f32 %v999, 0.16666667
        %v1256 = vmul.f32 %v1000, 0.16666667
        %v1257 = vmul.f32 %v1001, 0.16666667
        %v1258 = vmul.f32 %v1002, 0.16666667
        %v1259 = vmul.f32 %v1003, 0.16666667
        %v1260 = vmul.f32 %v1004, 0.16666667
        %v1261 = vmul.f32 %v1005, 0.16666667
        %v1262 = vmul.f32 %v1006, 0.16666667
        %v1263 = vmul.f32 %v1007, 0.16666667
        %v1264 = vmul.f32 %v1008, 0.16666667
        %v1265 = vmul.f32 %v1009, 0.16666667
        %v1266 = vmul.f32 %v1010, 0.16666667
        %v1267 = vmul.f32 %v1011, 0.16666667
        %v1268 = vmul.f32 %v1012, 0.16666667
        %v1269 = vmul.f32 %v1013, 0.16666667
        %v1270 = vmul.f32 %v1014, 0.16666667
        %v1271 = vmul.f32 %v1015, 0.16666667
        %v1272 = vmul.f32 %v1016, 0.16666667
        %v1273 = vmul.f32 %v1017, 0.16666667
        %v1274 = vmul.f32 %v1018, 0.16666667
        %v1275 = vmul.f32 %v1019, 0.16666667
        %v1276 = vmul.f32 %v1020, 0.16666667
        %v1277 = vmul.f32 %v1021, 0.16666667
        %v1278 = vmul.f32 %v1022, 0.16666667
        %v1279 = vmul.f32 %v1023, 0.16666667
        %v1280 = vmul.f32 %v1024, 0.16666667
        %v1281 = vmul.f32 %v1025, 0.16666667
        %v1282 = vmul.f32 %v1026, 0.16666667
        %v1283 = vmul.f32 %v1027, 0.16666667
        %v1284 = vmul.f32 %v1028, 0.16666667
        %v1285 = vmul.f32 %v1029, 0.16666667
        %v1286 = vmul.f32 %v1030, 0.16666667
        %v1287 = vmul.f32 %v1031, 0.16666667
        %v1288 = vmul.f32 %v1032, 0.16666667
        %v1289 = vmul.f32 %v1033, 0.16666667
        %v1290 = vmul.f32 %v1034, 0.16666667
        %v1291 = vmul.f32 %v1035, 0.16666667
        %v1292 = vmul.f32 %v1036, 0.16666667
        %v1293 = vmul.f32 %v1037, 0.16666667
        %v1294 = vmul.f32 %v1038, 0.16666667
        %v1295 = vmul.f32 %v1039, 0.16666667
        %v1296 = vmul.f32 %v1040, 0.16666667
        %v1297 = vmul.f32 %v1041, 0.16666667
        %v1298 = vmul.f32 %v1042, 0.16666667
        %v1299 = vmul.f32 %v1043, 0.16666667
        %v1300 = vmul.f32 %v1044, 0.16666667
        %v1301 = vmul.f32 %v1045, 0.16666667
        %v1302 = vmul.f32 %v1046, 0.16666667
        %v1303 = vmul.f32 %v1047, 0.16666667
        %v1304 = vmul.f32 %v1048, 0.16666667
        %v1305 = vmul.f32 %v1049, 0.16666667
        %v1306 = vmul.f32 %v1050, 0.16666667
        %v1307 = vmul.f32 %v1051, 0.16666667
        %v1308 = vmul.f32 %v1052, 0.16666667
        %v1309 = vmul.f32 %v1053, 0.16666667
        %v1310 = vmul.f32 %v1054, 0.16666667
        %v1311 = vmul.f32 %v1055, 0.16666667
        %v1312 = vmul.f32 %v1056, 0.16666667
        %v1313 = vmul.f32 %v1057, 0.16666667
        %v1314 = vmul.f32 %v1058, 0.16666667
        %v1315 = vmul.f32 %v1059, 0.16666667
        %v1316 = vmul.f32 %v1060, 0.16666667
        %v1317 = vmul.f32 %v1061, 0.16666667
        %v1318 = vmul.f32 %v1062, 0.16666667
        %v1319 = vmul.f32 %v1063, 0.16666667
        %v1320 = vmul.f32 %v1064, 0.16666667
        %v1321 = vmul.f32 %v1065, 0.16666667
        %v1322 = vmul.f32 %v1066, 0.16666667
        %v1323 = vmul.f32 %v1067, 0.16666667
        %v1324 = vmul.f32 %v1068, 0.16666667
        %v1325 = vmul.f32 %v1069, 0.16666667
        %v1326 = vmul.f32 %v1070, 0.16666667
        %v1327 = vmul.f32 %v1071, 0.16666667
        %v1328 = vmul.f32 %v1072, 0.16666667
        %v1329 = vmul.f32 %v1073, 0.16666667
        %v1330 = vmul.f32 %v1074, 0.16666667
        %v1331 = vmul.f32 %v1075, 0.16666667
        %v1332 = vmul.f32 %v1076, 0.16666667
        %v1333 = vmul.f32 %v1077, 0.16666667
        %v1334 = vmul.f32 %v1078, 0.16666667
        %v1335 = vmul.f32 %v1079, 0.16666667
        %v1336 = vmul.f32 %v1080, 0.16666667
        %v1337 = vmul.f32 %v1081, 0.16666667
        %v1338 = vmul.f32 %v1082, 0.16666667
        %v1339 = vmul.f32 %v1083, 0.16666667
        %v1340 = vmul.f32 %v1084, 0.16666667
        %v1341 = vmul.f32 %v1085, 0.16666667
        %v1342 = vmul.f32 %v1086, 0.16666667
        %v1343 = vmul.f32 %v1087, 0.16666667
        %v1344 = vmul.f32 %v1088, 0.16666667
        %v1345 = vmul.f32 %v1089, 0.16666667
        %v1346 = vmul.f32 %v1090, 0.16666667
        %v1347 = vmul.f32 %v1091, 0.16666667
        %v1348 = vmul.f32 %v1092, 0.16666667
        %v1349 = vmul.f32 %v1093, 0.16666667
        %v1350 = vmul.f32 %v1094, 0.16666667
        %v1351 = vmul.f32 %v1095, 0.16666667
        %v1352 = vmul.f32 %v1096, 0.16666667
        %v1353 = vmul.f32 %v1097, 0.16666667
        %v1354 = vmul.f32 %v1098, 0.16666667
        %v1355 = vmul.f32 %v1099, 0.16666667
        %v1356 = vmul.f32 %v1100, 0.16666667
        %v1357 = vmul.f32 %v1101, 0.16666667
        %v1358 = vmul.f32 %v1102, 0.16666667
        %v1359 = vmul.f32 %v1103, 0.16666667
        %v1360 = vmul.f32 %v1104, 0.16666667
        %v1361 = vmul.f32 %v1105, 0.16666667
        %v1362 = vmul.f32 %v1106, 0.16666667
        %v1363 = vmul.f32 %v1107, 0.16666667
        %v1364 = vmul.f32 %v1108, 0.16666667
        %v1365 = vmul.f32 %v1109, 0.16666667
        %v1366 = vmul.f32 %v1110, 0.16666667
        %v1367 = vmul.f32 %v1111, 0.16666667
        %v1368 = vmul.f32 %v1112, 0.16666667
        %v1369 = vmul.f32 %v1113, 0.16666667
        %v1370 = vmul.f32 %v1114, 0.16666667
        %v1371 = vmul.f32 %v1115, 0.16666667
        %v1372 = vmul.f32 %v1116, 0.16666667
        %v1373 = vmul.f32 %v1117, 0.16666667
        %v1374 = vmul.f32 %v1118, 0.16666667
        %v1375 = vmul.f32 %v1119, 0.16666667
        %v1376 = vmul.f32 %v1120, 0.16666667
        %v1377 = vmul.f32 %v1121, 0.16666667
        %v1378 = vmul.f32 %v1122, 0.16666667
        %v1379 = vmul.f32 %v1123, 0.16666667
        %v1380 = vmul.f32 %v1124, 0.16666667
        %v1381 = vmul.f32 %v1125, 0.16666667
        %v1382 = vmul.f32 %v1126, 0.16666667
        %v1383 = vmul.f32 %v1127, 0.16666667
        %v1384 = vmul.f32 %v1128, 0.16666667
        %v1385 = vmul.f32 %v1129, 0.16666667
        %v1386 = vmul.f32 %v1130, 0.16666667
        %v1387 = vmul.f32 %v1131, 0.16666667
        %v1388 = vmul.f32 %v1132, 0.16666667
        %v1389 = vmul.f32 %v1133, 0.16666667
        %v1390 = vmul.f32 %v1134, 0.16666667
        %v1391 = vmul.f32 %v1135, 0.16666667
        %v1392 = vmul.f32 %v1136, 0.16666667
        %v1393 = vmul.f32 %v1137, 0.16666667
        %v1394 = vmul.f32 %v1138, 0.16666667
        %v1395 = vmul.f32 %v1139, 0.16666667
        %v1396 = vmul.f32 %v1140, 0.16666667
        %v1397 = vmul.f32 %v1141, 0.16666667
        %v1398 = vmul.f32 %v1142, 0.16666667
        %v1399 = vmul.f32 %v1143, 0.16666667
        %v1400 = vmul.f32 %v1144, 0.16666667
        %v1401 = vmul.f32 %v1145, 0.16666667
        %v1402 = vmul.f32 %v1146, 0.16666667
        %v1403 = vmul.f32 %v1147, 0.16666667
        %v1404 = vmul.f32 %v1148, 0.16666667
        %v1405 = vmul.f32 %v1149, 0.16666667
        %v1406 = vmul.f32 %v1150, 0.16666667
        %v1407 = vmul.f32 %v1151, 0.16666667
        %v1408 = vmul.f32 %v1152, 0.16666667
        %v1409 = vmul.f32 %v1153, 0.16666667
        %v1410 = vmul.f32 %v1154, 0.16666667
        %v1411 = vmul.f32 %v1155, 0.16666667
        %v1412 = vmul.f32 %v1156, 0.16666667
        %v1413 = vmul.f32 %v1157, 0.16666667
        %v1414 = vmul.f32 %v1158, 0.16666667
        %v1415 = vmul.f32 %v1159, 0.16666667
        %v1416 = vmul.f32 %v1160, 0.16666667
        %v1417 = vmul.f32 %v1161, 0.16666667
        %v1418 = vmul.f32 %v1162, 0.16666667
        %1419 = vst [vmem:[%s136] sm:$0xff] %v1163
        %1420 = vst [vmem:[%s136 + $0x8] sm:$0xff] %v1164
        %1421 = vst [vmem:[%s136 + $0x10] sm:$0xff] %v1165
        %1422 = vst [vmem:[%s136 + $0x18] sm:$0xff] %v1166
        %1423 = vst [vmem:[%s136 + $0x20] sm:$0xff] %v1167
        %1424 = vst [vmem:[%s136 + $0x28] sm:$0xff] %v1168
        %1425 = vst [vmem:[%s136 + $0x30] sm:$0xff] %v1169
        %1426 = vst [vmem:[%s136 + $0x38] sm:$0xff] %v1170
        %1427 = vst [vmem:[%s136 + $0x40] sm:$0xff] %v1171
        %1428 = vst [vmem:[%s136 + $0x48] sm:$0xff] %v1172
        %1429 = vst [vmem:[%s136 + $0x50] sm:$0xff] %v1173
        %1430 = vst [vmem:[%s136 + $0x58] sm:$0xff] %v1174
        %1431 = vst [vmem:[%s136 + $0x60] sm:$0xff] %v1175
        %1432 = vst [vmem:[%s136 + $0x68] sm:$0xff] %v1176
        %1433 = vst [vmem:[%s136 + $0x70] sm:$0xff] %v1177
        %1434 = vst [vmem:[%s136 + $0x78] sm:$0xff] %v1178
        %1435 = vst [vmem:[%s136 + $0x80] sm:$0xff] %v1179
        %1436 = vst [vmem:[%s136 + $0x88] sm:$0xff] %v1180
        %1437 = vst [vmem:[%s136 + $0x90] sm:$0xff] %v1181
        %1438 = vst [vmem:[%s136 + $0x98] sm:$0xff] %v1182
        %1439 = vst [vmem:[%s136 + $0xa0] sm:$0xff] %v1183
        %1440 = vst [vmem:[%s136 + $0xa8] sm:$0xff] %v1184
        %1441 = vst [vmem:[%s136 + $0xb0] sm:$0xff] %v1185
        %1442 = vst [vmem:[%s136 + $0xb8] sm:$0xff] %v1186
        %1443 = vst [vmem:[%s136 + $0xc0] sm:$0xff] %v1187
        %1444 = vst [vmem:[%s136 + $0xc8] sm:$0xff] %v1188
        %1445 = vst [vmem:[%s136 + $0xd0] sm:$0xff] %v1189
        %1446 = vst [vmem:[%s136 + $0xd8] sm:$0xff] %v1190
        %1447 = vst [vmem:[%s136 + $0xe0] sm:$0xff] %v1191
        %1448 = vst [vmem:[%s136 + $0xe8] sm:$0xff] %v1192
        %1449 = vst [vmem:[%s136 + $0xf0] sm:$0xff] %v1193
        %1450 = vst [vmem:[%s136 + $0xf8] sm:$0xff] %v1194
        %1451 = vst [vmem:[%s136 + $0x100] sm:$0xff] %v1195
        %1452 = vst [vmem:[%s136 + $0x108] sm:$0xff] %v1196
        %1453 = vst [vmem:[%s136 + $0x110] sm:$0xff] %v1197
        %1454 = vst [vmem:[%s136 + $0x118] sm:$0xff] %v1198
        %1455 = vst [vmem:[%s136 + $0x120] sm:$0xff] %v1199
        %1456 = vst [vmem:[%s136 + $0x128] sm:$0xff] %v1200
        %1457 = vst [vmem:[%s136 + $0x130] sm:$0xff] %v1201
        %1458 = vst [vmem:[%s136 + $0x138] sm:$0xff] %v1202
        %1459 = vst [vmem:[%s136 + $0x140] sm:$0xff] %v1203
        %1460 = vst [vmem:[%s136 + $0x148] sm:$0xff] %v1204
        %1461 = vst [vmem:[%s136 + $0x150] sm:$0xff] %v1205
        %1462 = vst [vmem:[%s136 + $0x158] sm:$0xff] %v1206
        %1463 = vst [vmem:[%s136 + $0x160] sm:$0xff] %v1207
        %1464 = vst [vmem:[%s136 + $0x168] sm:$0xff] %v1208
        %1465 = vst [vmem:[%s136 + $0x170] sm:$0xff] %v1209
        %1466 = vst [vmem:[%s136 + $0x178] sm:$0xff] %v1210
        %1467 = vst [vmem:[%s136 + $0x180] sm:$0xff] %v1211
        %1468 = vst [vmem:[%s136 + $0x188] sm:$0xff] %v1212
        %1469 = vst [vmem:[%s136 + $0x190] sm:$0xff] %v1213
        %1470 = vst [vmem:[%s136 + $0x198] sm:$0xff] %v1214
        %1471 = vst [vmem:[%s136 + $0x1a0] sm:$0xff] %v1215
        %1472 = vst [vmem:[%s136 + $0x1a8] sm:$0xff] %v1216
        %1473 = vst [vmem:[%s136 + $0x1b0] sm:$0xff] %v1217
        %1474 = vst [vmem:[%s136 + $0x1b8] sm:$0xff] %v1218
        %1475 = vst [vmem:[%s136 + $0x1c0] sm:$0xff] %v1219
        %1476 = vst [vmem:[%s136 + $0x1c8] sm:$0xff] %v1220
        %1477 = vst [vmem:[%s136 + $0x1d0] sm:$0xff] %v1221
        %1478 = vst [vmem:[%s136 + $0x1d8] sm:$0xff] %v1222
        %1479 = vst [vmem:[%s136 + $0x1e0] sm:$0xff] %v1223
        %1480 = vst [vmem:[%s136 + $0x1e8] sm:$0xff] %v1224
        %1481 = vst [vmem:[%s136 + $0x1f0] sm:$0xff] %v1225
        %1482 = vst [vmem:[%s136 + $0x1f8] sm:$0xff] %v1226
        %1483 = vst [vmem:[%s136 + $0x200] sm:$0xff] %v1227
        %1484 = vst [vmem:[%s136 + $0x208] sm:$0xff] %v1228
        %1485 = vst [vmem:[%s136 + $0x210] sm:$0xff] %v1229
        %1486 = vst [vmem:[%s136 + $0x218] sm:$0xff] %v1230
        %1487 = vst [vmem:[%s136 + $0x220] sm:$0xff] %v1231
        %1488 = vst [vmem:[%s136 + $0x228] sm:$0xff] %v1232
        %1489 = vst [vmem:[%s136 + $0x230] sm:$0xff] %v1233
        %1490 = vst [vmem:[%s136 + $0x238] sm:$0xff] %v1234
        %1491 = vst [vmem:[%s136 + $0x240] sm:$0xff] %v1235
        %1492 = vst [vmem:[%s136 + $0x248] sm:$0xff] %v1236
        %1493 = vst [vmem:[%s136 + $0x250] sm:$0xff] %v1237
        %1494 = vst [vmem:[%s136 + $0x258] sm:$0xff] %v1238
        %1495 = vst [vmem:[%s136 + $0x260] sm:$0xff] %v1239
        %1496 = vst [vmem:[%s136 + $0x268] sm:$0xff] %v1240
        %1497 = vst [vmem:[%s136 + $0x270] sm:$0xff] %v1241
        %1498 = vst [vmem:[%s136 + $0x278] sm:$0xff] %v1242
        %1499 = vst [vmem:[%s136 + $0x280] sm:$0xff] %v1243
        %1500 = vst [vmem:[%s136 + $0x288] sm:$0xff] %v1244
        %1501 = vst [vmem:[%s136 + $0x290] sm:$0xff] %v1245
        %1502 = vst [vmem:[%s136 + $0x298] sm:$0xff] %v1246
        %1503 = vst [vmem:[%s136 + $0x2a0] sm:$0xff] %v1247
        %1504 = vst [vmem:[%s136 + $0x2a8] sm:$0xff] %v1248
        %1505 = vst [vmem:[%s136 + $0x2b0] sm:$0xff] %v1249
        %1506 = vst [vmem:[%s136 + $0x2b8] sm:$0xff] %v1250
        %1507 = vst [vmem:[%s136 + $0x2c0] sm:$0xff] %v1251
        %1508 = vst [vmem:[%s136 + $0x2c8] sm:$0xff] %v1252
        %1509 = vst [vmem:[%s136 + $0x2d0] sm:$0xff] %v1253
        %1510 = vst [vmem:[%s136 + $0x2d8] sm:$0xff] %v1254
        %1511 = vst [vmem:[%s136 + $0x2e0] sm:$0xff] %v1255
        %1512 = vst [vmem:[%s136 + $0x2e8] sm:$0xff] %v1256
        %1513 = vst [vmem:[%s136 + $0x2f0] sm:$0xff] %v1257
        %1514 = vst [vmem:[%s136 + $0x2f8] sm:$0xff] %v1258
        %1515 = vst [vmem:[%s136 + $0x300] sm:$0xff] %v1259
        %1516 = vst [vmem:[%s136 + $0x308] sm:$0xff] %v1260
        %1517 = vst [vmem:[%s136 + $0x310] sm:$0xff] %v1261
        %1518 = vst [vmem:[%s136 + $0x318] sm:$0xff] %v1262
        %1519 = vst [vmem:[%s136 + $0x320] sm:$0xff] %v1263
        %1520 = vst [vmem:[%s136 + $0x328] sm:$0xff] %v1264
        %1521 = vst [vmem:[%s136 + $0x330] sm:$0xff] %v1265
        %1522 = vst [vmem:[%s136 + $0x338] sm:$0xff] %v1266
        %1523 = vst [vmem:[%s136 + $0x340] sm:$0xff] %v1267
        %1524 = vst [vmem:[%s136 + $0x348] sm:$0xff] %v1268
        %1525 = vst [vmem:[%s136 + $0x350] sm:$0xff] %v1269
        %1526 = vst [vmem:[%s136 + $0x358] sm:$0xff] %v1270
        %1527 = vst [vmem:[%s136 + $0x360] sm:$0xff] %v1271
        %1528 = vst [vmem:[%s136 + $0x368] sm:$0xff] %v1272
        %1529 = vst [vmem:[%s136 + $0x370] sm:$0xff] %v1273
        %1530 = vst [vmem:[%s136 + $0x378] sm:$0xff] %v1274
        %1531 = vst [vmem:[%s136 + $0x380] sm:$0xff] %v1275
        %1532 = vst [vmem:[%s136 + $0x388] sm:$0xff] %v1276
        %1533 = vst [vmem:[%s136 + $0x390] sm:$0xff] %v1277
        %1534 = vst [vmem:[%s136 + $0x398] sm:$0xff] %v1278
        %1535 = vst [vmem:[%s136 + $0x3a0] sm:$0xff] %v1279
        %1536 = vst [vmem:[%s136 + $0x3a8] sm:$0xff] %v1280
        %1537 = vst [vmem:[%s136 + $0x3b0] sm:$0xff] %v1281
        %1538 = vst [vmem:[%s136 + $0x3b8] sm:$0xff] %v1282
        %1539 = vst [vmem:[%s136 + $0x3c0] sm:$0xff] %v1283
        %1540 = vst [vmem:[%s136 + $0x3c8] sm:$0xff] %v1284
        %1541 = vst [vmem:[%s136 + $0x3d0] sm:$0xff] %v1285
        %1542 = vst [vmem:[%s136 + $0x3d8] sm:$0xff] %v1286
        %1543 = vst [vmem:[%s136 + $0x3e0] sm:$0xff] %v1287
        %1544 = vst [vmem:[%s136 + $0x3e8] sm:$0xff] %v1288
        %1545 = vst [vmem:[%s136 + $0x3f0] sm:$0xff] %v1289
        %1546 = vst [vmem:[%s136 + $0x3f8] sm:$0xff] %v1290
        %1547 = vst [vmem:[%s136 + $0x400] sm:$0xff] %v1291
        %1548 = vst [vmem:[%s136 + $0x408] sm:$0xff] %v1292
        %1549 = vst [vmem:[%s136 + $0x410] sm:$0xff] %v1293
        %1550 = vst [vmem:[%s136 + $0x418] sm:$0xff] %v1294
        %1551 = vst [vmem:[%s136 + $0x420] sm:$0xff] %v1295
        %1552 = vst [vmem:[%s136 + $0x428] sm:$0xff] %v1296
        %1553 = vst [vmem:[%s136 + $0x430] sm:$0xff] %v1297
        %1554 = vst [vmem:[%s136 + $0x438] sm:$0xff] %v1298
        %1555 = vst [vmem:[%s136 + $0x440] sm:$0xff] %v1299
        %1556 = vst [vmem:[%s136 + $0x448] sm:$0xff] %v1300
        %1557 = vst [vmem:[%s136 + $0x450] sm:$0xff] %v1301
        %1558 = vst [vmem:[%s136 + $0x458] sm:$0xff] %v1302
        %1559 = vst [vmem:[%s136 + $0x460] sm:$0xff] %v1303
        %1560 = vst [vmem:[%s136 + $0x468] sm:$0xff] %v1304
        %1561 = vst [vmem:[%s136 + $0x470] sm:$0xff] %v1305
        %1562 = vst [vmem:[%s136 + $0x478] sm:$0xff] %v1306
        %1563 = vst [vmem:[%s136 + $0x480] sm:$0xff] %v1307
        %1564 = vst [vmem:[%s136 + $0x488] sm:$0xff] %v1308
        %1565 = vst [vmem:[%s136 + $0x490] sm:$0xff] %v1309
        %1566 = vst [vmem:[%s136 + $0x498] sm:$0xff] %v1310
        %1567 = vst [vmem:[%s136 + $0x4a0] sm:$0xff] %v1311
        %1568 = vst [vmem:[%s136 + $0x4a8] sm:$0xff] %v1312
        %1569 = vst [vmem:[%s136 + $0x4b0] sm:$0xff] %v1313
        %1570 = vst [vmem:[%s136 + $0x4b8] sm:$0xff] %v1314
        %1571 = vst [vmem:[%s136 + $0x4c0] sm:$0xff] %v1315
        %1572 = vst [vmem:[%s136 + $0x4c8] sm:$0xff] %v1316
        %1573 = vst [vmem:[%s136 + $0x4d0] sm:$0xff] %v1317
        %1574 = vst [vmem:[%s136 + $0x4d8] sm:$0xff] %v1318
        %1575 = vst [vmem:[%s136 + $0x4e0] sm:$0xff] %v1319
        %1576 = vst [vmem:[%s136 + $0x4e8] sm:$0xff] %v1320
        %1577 = vst [vmem:[%s136 + $0x4f0] sm:$0xff] %v1321
        %1578 = vst [vmem:[%s136 + $0x4f8] sm:$0xff] %v1322
        %1579 = vst [vmem:[%s136 + $0x500] sm:$0xff] %v1323
        %1580 = vst [vmem:[%s136 + $0x508] sm:$0xff] %v1324
        %1581 = vst [vmem:[%s136 + $0x510] sm:$0xff] %v1325
        %1582 = vst [vmem:[%s136 + $0x518] sm:$0xff] %v1326
        %1583 = vst [vmem:[%s136 + $0x520] sm:$0xff] %v1327
        %1584 = vst [vmem:[%s136 + $0x528] sm:$0xff] %v1328
        %1585 = vst [vmem:[%s136 + $0x530] sm:$0xff] %v1329
        %1586 = vst [vmem:[%s136 + $0x538] sm:$0xff] %v1330
        %1587 = vst [vmem:[%s136 + $0x540] sm:$0xff] %v1331
        %1588 = vst [vmem:[%s136 + $0x548] sm:$0xff] %v1332
        %1589 = vst [vmem:[%s136 + $0x550] sm:$0xff] %v1333
        %1590 = vst [vmem:[%s136 + $0x558] sm:$0xff] %v1334
        %1591 = vst [vmem:[%s136 + $0x560] sm:$0xff] %v1335
        %1592 = vst [vmem:[%s136 + $0x568] sm:$0xff] %v1336
        %1593 = vst [vmem:[%s136 + $0x570] sm:$0xff] %v1337
        %1594 = vst [vmem:[%s136 + $0x578] sm:$0xff] %v1338
        %1595 = vst [vmem:[%s136 + $0x580] sm:$0xff] %v1339
        %1596 = vst [vmem:[%s136 + $0x588] sm:$0xff] %v1340
        %1597 = vst [vmem:[%s136 + $0x590] sm:$0xff] %v1341
        %1598 = vst [vmem:[%s136 + $0x598] sm:$0xff] %v1342
        %1599 = vst [vmem:[%s136 + $0x5a0] sm:$0xff] %v1343
        %1600 = vst [vmem:[%s136 + $0x5a8] sm:$0xff] %v1344
        %1601 = vst [vmem:[%s136 + $0x5b0] sm:$0xff] %v1345
        %1602 = vst [vmem:[%s136 + $0x5b8] sm:$0xff] %v1346
        %1603 = vst [vmem:[%s136 + $0x5c0] sm:$0xff] %v1347
        %1604 = vst [vmem:[%s136 + $0x5c8] sm:$0xff] %v1348
        %1605 = vst [vmem:[%s136 + $0x5d0] sm:$0xff] %v1349
        %1606 = vst [vmem:[%s136 + $0x5d8] sm:$0xff] %v1350
        %1607 = vst [vmem:[%s136 + $0x5e0] sm:$0xff] %v1351
        %1608 = vst [vmem:[%s136 + $0x5e8] sm:$0xff] %v1352
        %1609 = vst [vmem:[%s136 + $0x5f0] sm:$0xff] %v1353
        %1610 = vst [vmem:[%s136 + $0x5f8] sm:$0xff] %v1354
        %1611 = vst [vmem:[%s136 + $0x600] sm:$0xff] %v1355
        %1612 = vst [vmem:[%s136 + $0x608] sm:$0xff] %v1356
        %1613 = vst [vmem:[%s136 + $0x610] sm:$0xff] %v1357
        %1614 = vst [vmem:[%s136 + $0x618] sm:$0xff] %v1358
        %1615 = vst [vmem:[%s136 + $0x620] sm:$0xff] %v1359
        %1616 = vst [vmem:[%s136 + $0x628] sm:$0xff] %v1360
        %1617 = vst [vmem:[%s136 + $0x630] sm:$0xff] %v1361
        %1618 = vst [vmem:[%s136 + $0x638] sm:$0xff] %v1362
        %1619 = vst [vmem:[%s136 + $0x640] sm:$0xff] %v1363
        %1620 = vst [vmem:[%s136 + $0x648] sm:$0xff] %v1364
        %1621 = vst [vmem:[%s136 + $0x650] sm:$0xff] %v1365
        %1622 = vst [vmem:[%s136 + $0x658] sm:$0xff] %v1366
        %1623 = vst [vmem:[%s136 + $0x660] sm:$0xff] %v1367
        %1624 = vst [vmem:[%s136 + $0x668] sm:$0xff] %v1368
        %1625 = vst [vmem:[%s136 + $0x670] sm:$0xff] %v1369
        %1626 = vst [vmem:[%s136 + $0x678] sm:$0xff] %v1370
        %1627 = vst [vmem:[%s136 + $0x680] sm:$0xff] %v1371
        %1628 = vst [vmem:[%s136 + $0x688] sm:$0xff] %v1372
        %1629 = vst [vmem:[%s136 + $0x690] sm:$0xff] %v1373
        %1630 = vst [vmem:[%s136 + $0x698] sm:$0xff] %v1374
        %1631 = vst [vmem:[%s136 + $0x6a0] sm:$0xff] %v1375
        %1632 = vst [vmem:[%s136 + $0x6a8] sm:$0xff] %v1376
        %1633 = vst [vmem:[%s136 + $0x6b0] sm:$0xff] %v1377
        %1634 = vst [vmem:[%s136 + $0x6b8] sm:$0xff] %v1378
        %1635 = vst [vmem:[%s136 + $0x6c0] sm:$0xff] %v1379
        %1636 = vst [vmem:[%s136 + $0x6c8] sm:$0xff] %v1380
        %1637 = vst [vmem:[%s136 + $0x6d0] sm:$0xff] %v1381
        %1638 = vst [vmem:[%s136 + $0x6d8] sm:$0xff] %v1382
        %1639 = vst [vmem:[%s136 + $0x6e0] sm:$0xff] %v1383
        %1640 = vst [vmem:[%s136 + $0x6e8] sm:$0xff] %v1384
        %1641 = vst [vmem:[%s136 + $0x6f0] sm:$0xff] %v1385
        %1642 = vst [vmem:[%s136 + $0x6f8] sm:$0xff] %v1386
        %1643 = vst [vmem:[%s136 + $0x700] sm:$0xff] %v1387
        %1644 = vst [vmem:[%s136 + $0x708] sm:$0xff] %v1388
        %1645 = vst [vmem:[%s136 + $0x710] sm:$0xff] %v1389
        %1646 = vst [vmem:[%s136 + $0x718] sm:$0xff] %v1390
        %1647 = vst [vmem:[%s136 + $0x720] sm:$0xff] %v1391
        %1648 = vst [vmem:[%s136 + $0x728] sm:$0xff] %v1392
        %1649 = vst [vmem:[%s136 + $0x730] sm:$0xff] %v1393
        %1650 = vst [vmem:[%s136 + $0x738] sm:$0xff] %v1394
        %1651 = vst [vmem:[%s136 + $0x740] sm:$0xff] %v1395
        %1652 = vst [vmem:[%s136 + $0x748] sm:$0xff] %v1396
        %1653 = vst [vmem:[%s136 + $0x750] sm:$0xff] %v1397
        %1654 = vst [vmem:[%s136 + $0x758] sm:$0xff] %v1398
        %1655 = vst [vmem:[%s136 + $0x760] sm:$0xff] %v1399
        %1656 = vst [vmem:[%s136 + $0x768] sm:$0xff] %v1400
        %1657 = vst [vmem:[%s136 + $0x770] sm:$0xff] %v1401
        %1658 = vst [vmem:[%s136 + $0x778] sm:$0xff] %v1402
        %1659 = vst [vmem:[%s136 + $0x780] sm:$0xff] %v1403
        %1660 = vst [vmem:[%s136 + $0x788] sm:$0xff] %v1404
        %1661 = vst [vmem:[%s136 + $0x790] sm:$0xff] %v1405
        %1662 = vst [vmem:[%s136 + $0x798] sm:$0xff] %v1406
        %1663 = vst [vmem:[%s136 + $0x7a0] sm:$0xff] %v1407
        %1664 = vst [vmem:[%s136 + $0x7a8] sm:$0xff] %v1408
        %1665 = vst [vmem:[%s136 + $0x7b0] sm:$0xff] %v1409
        %1666 = vst [vmem:[%s136 + $0x7b8] sm:$0xff] %v1410
        %1667 = vst [vmem:[%s136 + $0x7c0] sm:$0xff] %v1411
        %1668 = vst [vmem:[%s136 + $0x7c8] sm:$0xff] %v1412
        %1669 = vst [vmem:[%s136 + $0x7d0] sm:$0xff] %v1413
        %1670 = vst [vmem:[%s136 + $0x7d8] sm:$0xff] %v1414
        %1671 = vst [vmem:[%s136 + $0x7e0] sm:$0xff] %v1415
        %1672 = vst [vmem:[%s136 + $0x7e8] sm:$0xff] %v1416
        %1673 = vst [vmem:[%s136 + $0x7f0] sm:$0xff] %v1417
        %1674 = vst [vmem:[%s136 + $0x7f8] sm:$0xff] %v1418
        %s1675 = sand.u32 %s52, 1
        %s1676 = scalar_lea.sflag [#allocation4], %s1675
        %s1677 = sand.u32 %s52, 1
        %s1678 = smul.addr %s1677, 2048
        %s1679 = scalar_lea.vmem [#allocation5], %s1678
        // Predicated region
        $region29: #{tpu_custom_call.1} parent=23 // pred_check
          %p1680 = pneg %p62
        $region30: #{tpu_custom_call.1} parent=23 // pred_check_branch
          %1682 = sbr.rel (%p1680) target = $region32
        $region31: #{tpu_custom_call.1} parent=23 // pred_region
          %s1683 = smul.u32 256, %s18
          %1685 = vsyncadd %s1676, 0
          %s1686 = smul.addr %s1683, 8
          %s1687 = scalar_lea.hbm %s1, %s1686
          %s1688 = sshll.u32 %s1679, 4
          %s1689 = int_to_ptr.vmem [resolvable:$true] %s1688
          %s1690 = sshll.u32 %s1687, 4
          %s1691 = int_to_ptr.hbm [resolvable:$true] %s1690
          %1696 = dma.vmem_to_hbm [thread:$0]  %s1689, 32768, %s1691, %s1676, 128, 128, 8
        $region32: #{tpu_custom_call.1} parent=23 // pred_fallthru
          _
      $region24: #{tpu_custom_call.1} parent=5 // pred_fallthru
        _
      %p1697 = scmp.le.s32.totalorder 2, %s13
      // Predicated region
      $region33: #{tpu_custom_call.1} parent=5 // pred_check
        %p1698 = pneg %p1697
      $region34: #{tpu_custom_call.1} parent=5 // pred_check_branch
        %1700 = sbr.rel (%p1698) target = $region36
      $region35: #{tpu_custom_call.1} parent=5 // pred_region
        %s1701 = ssub.s32 %s13, 2
        // Predicated region
        $region37: #{tpu_custom_call.1} parent=35 // pred_check
          %p1702 = pneg %p68
        $region38: #{tpu_custom_call.1} parent=35 // pred_check_branch
          %1704 = sbr.rel (%p1702) target = $region40
        $region39: #{tpu_custom_call.1} parent=35 // pred_region
          %s1705 = sand.u32 %s53, 1
          %s1706 = scalar_lea.sflag [#allocation4], %s1705
          %s1707 = sand.u32 %s53, 1
          %s1708 = smul.addr %s1707, 2048
          %s1709 = scalar_lea.vmem [#allocation5], %s1708
          %1711 = dma.done %s1706, 32768
        $region40: #{tpu_custom_call.1} parent=35 // pred_fallthru
          _
      $region36: #{tpu_custom_call.1} parent=5 // pred_fallthru
        _
    $region6: #{tpu_custom_call.1} parent=1 // loop_footer
      %s17 = sadd.s32 1, %s13
    $region7: #{tpu_custom_call.1} parent=1 // loop_footer_branch
      %12 = sbr.rel target = $region3
    $region8: #{tpu_custom_call.1} parent=1 // loop_exit
      _
    %1712 = vsyncpa [#allocation3], 1
    %s1713 = scalar_lea.sflag [#allocation3], 1
    %1714 = vsyncpa %s1713, 1
    %1715 = vsyncpa [#allocation4], 1
    %s1716 = scalar_lea.sflag [#allocation4], 1
    %1717 = vsyncpa %s1716, 1

</llo_original>
